<compile_context>
chip_gen: v7x
topology: tpu7x:2x2x1
jax: 0.10.0
libtpu: 0.0.40
codegen_flags: <defaults>
</compile_context>

<pallas_src>
import math

import jax
import jax.numpy as jnp
import numpy as np
from jax.experimental import pallas as pl
from jax.experimental.pallas import tpu as pltpu


def _round_up(x, m):
    return ((x + m - 1) // m) * m


def _disc_kernel(x_ref, w1_ref, b1_ref, w2_ref, b2_ref, w3_ref, b3_ref, o_ref,
                 xp_ref):
    # Fused: Linear(784->512) + LeakyReLU(0.2) + Linear(512->256) + LeakyReLU(0.2)
    #        + Linear(256->1 [weights padded to 128 cols]) + Sigmoid
    D = x_ref.shape[1]          # 784 (raw feature dim)
    tb, Dp = xp_ref.shape       # (batch tile, 896 = lane-aligned feature dim)

    # Cast the raw f32 tile to bf16 and place it in a zero-padded, lane-aligned
    # VMEM scratch (pad lanes re-zeroed every step -> megacore/grid-order safe).
    if Dp > D:
        z0 = (D // 128) * 128   # aligned start of the last lane tile
        xp_ref[:, z0:] = jnp.zeros((tb, Dp - z0), jnp.bfloat16)
    xp_ref[:, :D] = x_ref[...].astype(jnp.bfloat16)
    x = xp_ref[...]             # (tb, Dp) bf16, fully aligned for the MXU

    h1 = jnp.dot(x, w1_ref[...], preferred_element_type=jnp.float32) + b1_ref[...]
    h1 = jnp.where(h1 > 0, h1, 0.2 * h1).astype(jnp.bfloat16)          # LeakyReLU(0.2)

    h2 = jnp.dot(h1, w2_ref[...], preferred_element_type=jnp.float32) + b2_ref[...]
    h2 = jnp.where(h2 > 0, h2, 0.2 * h2).astype(jnp.bfloat16)          # LeakyReLU(0.2)

    logits = jnp.dot(h2, w3_ref[...], preferred_element_type=jnp.float32) + b3_ref[...]
    z = logits[:, 0:1]          # only column 0 is real (rest is zero-padding)
    # Sigmoid: exp + approx reciprocal both run on the EUP slot.
    o_ref[...] = pl.reciprocal(1.0 + jnp.exp(-z), approx=True)


def init_params(key, img_dim):
    """nn.Linear-style init: U(-1/sqrt(fan_in), +1/sqrt(fan_in)).

    Weights are (in, out) f32 — transposed relative to PyTorch's (out, in).
    Biases are (1, out) f32.
    """
    sizes = [(img_dim, 512), (512, 256), (256, 1)]
    params = []
    for (fan_in, fan_out) in sizes:
        key, kw, kb = jax.random.split(key, 3)
        bound = 1.0 / math.sqrt(fan_in)
        w = jax.random.uniform(kw, (fan_in, fan_out), jnp.float32, -bound, bound)
        b = jax.random.uniform(kb, (1, fan_out), jnp.float32, -bound, bound)
        params.extend([w, b])
    return tuple(params)


def prepare_params(params, *, training=True, lane=128):
    """One-time transform of logical f32 params into kernel-ready bf16 params.

    - Folds eval-mode normalize (x-0.5)/0.5 = 2x-1 into w1/b1 (eval only).
    - Zero-pads w1's input dim up to a multiple of 128 lanes (x is padded
      in-kernel to match).
    - Zero-pads the last layer (w3, b3) out to 128 columns.
    - Casts weights to bf16 (f32 accumulation in the kernel); biases stay f32.
    """
    w1, b1, w2, b2, w3, b3 = params
    if not training:
        # (2x - 1) @ w1 + b1 == x @ (2*w1) + (b1 - colsum(w1)); fold in f32.
        b1 = b1 - jnp.sum(w1, axis=0, keepdims=True)
        w1 = 2.0 * w1

    D = w1.shape[0]
    Dp = _round_up(D, lane)
    if Dp != D:
        w1 = jnp.pad(w1, ((0, Dp - D), (0, 0)))

    n_out = w3.shape[1]
    Np = _round_up(max(n_out, 1), lane)
    if Np != n_out:
        w3 = jnp.pad(w3, ((0, 0), (0, Np - n_out)))
        b3 = jnp.pad(b3, ((0, 0), (0, Np - n_out)))

    return dict(
        w1=w1.astype(jnp.bfloat16), b1=b1.astype(jnp.float32),
        w2=w2.astype(jnp.bfloat16), b2=b2.astype(jnp.float32),
        w3=w3.astype(jnp.bfloat16), b3=b3.astype(jnp.float32),
        in_dim=D, in_dim_padded=Dp, out_dim=n_out, out_dim_padded=Np,
        training=training,
    )


def discriminator_forward(x, kparams, *, block_b=None):
    """x: (B, C, H, W) float32. Returns (B, 1) float32 in [0, 1]."""
    B = x.shape[0]
    D = int(np.prod(x.shape[1:]))
    assert D == kparams["in_dim"], "input feature dim does not match params"
    Dp = kparams["in_dim_padded"]
    Np = kparams["out_dim_padded"]

    # Flatten exactly like torch .view(B, -1). Stays f32; no feature padding or
    # dtype cast here (done in-kernel) -> no extra HBM pass.
    x2d = x.reshape(B, D)

    # Batch tile: multiple of 8 sublanes, >= 2 grid steps whenever possible
    # (v7x megacore), capped at 1024 rows to amortize per-step overhead while
    # keeping the pipeline well under the VMEM limit on all generations.
    if block_b is not None:
        tb = _round_up(block_b, 8)
    else:
        tb = min(1024, _round_up(max((B + 1) // 2, 8), 8))
    Bp = _round_up(B, tb)
    if Bp != B:
        x2d = jnp.pad(x2d, ((0, Bp - B), (0, 0)))

    w1, b1 = kparams["w1"], kparams["b1"]
    w2, b2 = kparams["w2"], kparams["b2"]
    w3, b3 = kparams["w3"], kparams["b3"]
    H1 = w1.shape[1]
    H2 = w2.shape[1]

    weight_elems = Dp * H1 + H1 * H2 + H2 * Np
    cost = pl.CostEstimate(
        flops=2 * Bp * weight_elems,
        transcendentals=2 * Bp,                       # exp + reciprocal per row
        bytes_accessed=(Bp * D * 4                    # f32 input
                        + weight_elems * 2            # bf16 weights
                        + (H1 + H2 + Np) * 4          # f32 biases
                        + Bp * 4),                    # f32 output
    )

    grid = (Bp // tb,)
    out = pl.pallas_call(
        _disc_kernel,
        out_shape=jax.ShapeDtypeStruct((Bp, 1), jnp.float32),
        grid=grid,
        in_specs=[
            pl.BlockSpec((tb, D), lambda i: (i, 0)),
            # Weights/biases: constant block index -> stay resident across steps.
            pl.BlockSpec((Dp, H1), lambda i: (0, 0)),
            pl.BlockSpec((1, H1), lambda i: (0, 0)),
            pl.BlockSpec((H1, H2), lambda i: (0, 0)),
            pl.BlockSpec((1, H2), lambda i: (0, 0)),
            pl.BlockSpec((H2, Np), lambda i: (0, 0)),
            pl.BlockSpec((1, Np), lambda i: (0, 0)),
        ],
        out_specs=pl.BlockSpec((tb, 1), lambda i: (i, 0)),
        scratch_shapes=[pltpu.VMEM((tb, Dp), jnp.bfloat16)],
        compiler_params=pltpu.CompilerParams(
            dimension_semantics=("parallel",),
            vmem_limit_bytes=32 * 1024 * 1024,
        ),
        cost_estimate=cost,
    )(x2d, w1, b1, w2, b2, w3, b3)

    return out[:B]


# ----------------------------------------------------------------------------
# References for validation
# ----------------------------------------------------------------------------

def _reference_forward_f32(x, params, training=True):
    """Plain-JAX f32 reference matching the PyTorch module semantics."""
    if not training:
        x = (x - 0.5) / 0.5
    B = x.shape[0]
    h = x.reshape(B, -1)
    w1, b1, w2, b2, w3, b3 = params
    h = h @ w1 + b1
    h = jnp.where(h > 0, h, 0.2 * h)
    h = h @ w2 + b2
    h = jnp.where(h > 0, h, 0.2 * h)
    return jax.nn.sigmoid(h @ w3 + b3)


def _reference_forward_bf16(x, kparams):
    """Plain-JAX mirror of the kernel math (bf16 inputs/weights, f32 accumulation)."""
    B = x.shape[0]
    D, Dp = kparams["in_dim"], kparams["in_dim_padded"]
    h = x.reshape(B, -1).astype(jnp.bfloat16)
    if Dp != D:
        h = jnp.pad(h, ((0, 0), (0, Dp - D)))
    h = jnp.dot(h, kparams["w1"], preferred_element_type=jnp.float32) + kparams["b1"]
    h = jnp.where(h > 0, h, 0.2 * h).astype(jnp.bfloat16)
    h = jnp.dot(h, kparams["w2"], preferred_element_type=jnp.float32) + kparams["b2"]
    h = jnp.where(h > 0, h, 0.2 * h).astype(jnp.bfloat16)
    z = jnp.dot(h, kparams["w3"], preferred_element_type=jnp.float32) + kparams["b3"]
    return jax.nn.sigmoid(z[:, : kparams["out_dim"]])


if __name__ == "__main__":
    # Default module config: img_shape = (1, 28, 28) -> img_dim = 784
    img_shape = (1, 28, 28)
    img_dim = img_shape[1] * img_shape[2]

    key = jax.random.PRNGKey(0)
    kx, kp = jax.random.split(key)
    params = init_params(kp, img_dim)

    # batch=8: single grid step; batch=300: 2 parallel steps + batch padding.
    for batch in (8, 300):
        x = jax.random.uniform(kx, (batch,) + img_shape, dtype=jnp.float32)
        for training in (True, False):   # training=True skips Normalize (module default)
            kparams = prepare_params(params, training=training)
            out = jax.block_until_ready(discriminator_forward(x, kparams))
            assert out.shape == (batch, 1)

            # Tight check against an exact bf16 mirror of the kernel math.
            ref_bf16 = _reference_forward_bf16(x, kparams)
            np.testing.assert_allclose(np.asarray(out), np.asarray(ref_bf16),
                                       rtol=0, atol=5e-3)

            # Loose check against full-precision module semantics.
            ref_f32 = _reference_forward_f32(x, params, training=training)
            np.testing.assert_allclose(np.asarray(out), np.asarray(ref_f32),
                                       rtol=0, atol=5e-2)

    print("KERNEL_OK")
</pallas_src>

<mosaic_0001>
module attributes {stable_mosaic.version = 11 : i64} {
  func.func @_disc_kernel(%arg0: i32, %arg1: memref<8x784xf32, #tpu.memory_space<vmem>>, %arg2: memref<896x512xbf16, #tpu.memory_space<vmem>>, %arg3: memref<1x512xf32, #tpu.memory_space<vmem>>, %arg4: memref<512x256xbf16, #tpu.memory_space<vmem>>, %arg5: memref<1x256xf32, #tpu.memory_space<vmem>>, %arg6: memref<256x128xbf16, #tpu.memory_space<vmem>>, %arg7: memref<1x128xf32, #tpu.memory_space<vmem>>, %arg8: memref<8x1xf32, #tpu.memory_space<vmem>>, %arg9: memref<8x896xbf16, #tpu.memory_space<vmem>>) attributes {dimension_semantics = [#tpu.dimension_semantics<parallel>], iteration_bounds = array<i64: 1>, scalar_prefetch = 0 : i64, scratch_operands = 1 : i64, tpu.core_type = #tpu.core_type<tc>, window_params = [{transform_indices = @transform_0, window_bounds = array<i64: 8, 784>}, {pipeline_mode = #tpu.pipeline_mode<synchronous>, transform_indices = @transform_1, window_bounds = array<i64: 896, 512>}, {pipeline_mode = #tpu.pipeline_mode<synchronous>, transform_indices = @transform_2, window_bounds = array<i64: 1, 512>}, {pipeline_mode = #tpu.pipeline_mode<synchronous>, transform_indices = @transform_3, window_bounds = array<i64: 512, 256>}, {pipeline_mode = #tpu.pipeline_mode<synchronous>, transform_indices = @transform_4, window_bounds = array<i64: 1, 256>}, {pipeline_mode = #tpu.pipeline_mode<synchronous>, transform_indices = @transform_5, window_bounds = array<i64: 256, 128>}, {pipeline_mode = #tpu.pipeline_mode<synchronous>, transform_indices = @transform_6, window_bounds = array<i64: 1, 128>}, {transform_indices = @transform_7, window_bounds = array<i64: 8, 1>}]} {
    %cst = arith.constant 0.000000e+00 : bf16
    %0 = vector.broadcast %cst : bf16 to vector<8x128xbf16>
    %c0 = arith.constant 0 : index
    %c768 = arith.constant 768 : index
    %1 = vector.load %arg9[%c0, %c768] : memref<8x896xbf16, #tpu.memory_space<vmem>>, vector<8x128xbf16>
    tpu.vector_store %arg9[%c0, %c768], %0 {strides = array<i32>} : memref<8x896xbf16, #tpu.memory_space<vmem>>, vector<8x128xbf16>,
    %c0_0 = arith.constant 0 : index
    %c0_1 = arith.constant 0 : index
    %2 = vector.load %arg1[%c0_0, %c0_1] : memref<8x784xf32, #tpu.memory_space<vmem>>, vector<8x784xf32>
    %3 = arith.truncf %2 : vector<8x784xf32> to vector<8x784xbf16>
    %c0_2 = arith.constant 0 : index
    %c0_3 = arith.constant 0 : index
    %4 = vector.load %arg9[%c0_2, %c0_3] : memref<8x896xbf16, #tpu.memory_space<vmem>>, vector<8x784xbf16>
    tpu.vector_store %arg9[%c0_2, %c0_3], %3 {strides = array<i32>} : memref<8x896xbf16, #tpu.memory_space<vmem>>, vector<8x784xbf16>,
    %c0_4 = arith.constant 0 : index
    %c0_5 = arith.constant 0 : index
    %5 = vector.load %arg9[%c0_4, %c0_5] : memref<8x896xbf16, #tpu.memory_space<vmem>>, vector<8x896xbf16>
    %c0_6 = arith.constant 0 : index
    %c0_7 = arith.constant 0 : index
    %6 = vector.load %arg2[%c0_6, %c0_7] : memref<896x512xbf16, #tpu.memory_space<vmem>>, vector<896x512xbf16>
    %cst_8 = arith.constant dense<0.000000e+00> : vector<8x512xf32>
    %7 = tpu.matmul %5, %6, %cst_8 {dimension_numbers = #tpu.dot_dimension_numbers<[1], [0], [0], [1], [0, 0, 1, 1], [], []>} : vector<8x896xbf16>, vector<896x512xbf16>, vector<8x512xf32> -> vector<8x512xf32>
    %c0_9 = arith.constant 0 : index
    %c0_10 = arith.constant 0 : index
    %8 = vector.load %arg3[%c0_9, %c0_10] : memref<1x512xf32, #tpu.memory_space<vmem>>, vector<1x512xf32>
    %9 = vector.broadcast %8 : vector<1x512xf32> to vector<8x512xf32>
    %10 = arith.addf %7, %9 : vector<8x512xf32>
    %cst_11 = arith.constant 0.000000e+00 : f32
    %11 = vector.broadcast %cst_11 : f32 to vector<8x512xf32>
    %12 = arith.cmpf ogt, %10, %11 : vector<8x512xf32>
    %cst_12 = arith.constant 2.000000e-01 : f32
    %13 = vector.broadcast %cst_12 : f32 to vector<8x512xf32>
    %14 = arith.mulf %13, %10 : vector<8x512xf32>
    %15 = arith.select %12, %10, %14 : vector<8x512xi1>, vector<8x512xf32>
    %16 = arith.truncf %15 : vector<8x512xf32> to vector<8x512xbf16>
    %c0_13 = arith.constant 0 : index
    %c0_14 = arith.constant 0 : index
    %17 = vector.load %arg4[%c0_13, %c0_14] : memref<512x256xbf16, #tpu.memory_space<vmem>>, vector<512x256xbf16>
    %cst_15 = arith.constant dense<0.000000e+00> : vector<8x256xf32>
    %18 = tpu.matmul %16, %17, %cst_15 {dimension_numbers = #tpu.dot_dimension_numbers<[1], [0], [0], [1], [0, 0, 1, 1], [], []>} : vector<8x512xbf16>, vector<512x256xbf16>, vector<8x256xf32> -> vector<8x256xf32>
    %c0_16 = arith.constant 0 : index
    %c0_17 = arith.constant 0 : index
    %19 = vector.load %arg5[%c0_16, %c0_17] : memref<1x256xf32, #tpu.memory_space<vmem>>, vector<1x256xf32>
    %20 = vector.broadcast %19 : vector<1x256xf32> to vector<8x256xf32>
    %21 = arith.addf %18, %20 : vector<8x256xf32>
    %cst_18 = arith.constant 0.000000e+00 : f32
    %22 = vector.broadcast %cst_18 : f32 to vector<8x256xf32>
    %23 = arith.cmpf ogt, %21, %22 : vector<8x256xf32>
    %cst_19 = arith.constant 2.000000e-01 : f32
    %24 = vector.broadcast %cst_19 : f32 to vector<8x256xf32>
    %25 = arith.mulf %24, %21 : vector<8x256xf32>
    %26 = arith.select %23, %21, %25 : vector<8x256xi1>, vector<8x256xf32>
    %27 = arith.truncf %26 : vector<8x256xf32> to vector<8x256xbf16>
    %c0_20 = arith.constant 0 : index
    %c0_21 = arith.constant 0 : index
    %28 = vector.load %arg6[%c0_20, %c0_21] : memref<256x128xbf16, #tpu.memory_space<vmem>>, vector<256x128xbf16>
    %cst_22 = arith.constant dense<0.000000e+00> : vector<8x128xf32>
    %29 = tpu.matmul %27, %28, %cst_22 {dimension_numbers = #tpu.dot_dimension_numbers<[1], [0], [0], [1], [0, 0, 1, 1], [], []>} : vector<8x256xbf16>, vector<256x128xbf16>, vector<8x128xf32> -> vector<8x128xf32>
    %c0_23 = arith.constant 0 : index
    %c0_24 = arith.constant 0 : index
    %30 = vector.load %arg7[%c0_23, %c0_24] : memref<1x128xf32, #tpu.memory_space<vmem>>, vector<1x128xf32>
    %31 = vector.broadcast %30 : vector<1x128xf32> to vector<8x128xf32>
    %32 = arith.addf %29, %31 : vector<8x128xf32>
    %33 = vector.extract_strided_slice %32 {offsets = [0, 0], sizes = [8, 1], strides = [1, 1]} : vector<8x128xf32> to vector<8x1xf32>
    %cst_25 = arith.constant 0.000000e+00 : f32
    %34 = vector.broadcast %cst_25 : f32 to vector<8x1xf32>
    %35 = arith.subf %34, %33 : vector<8x1xf32>
    %36 = math.exp %35 : vector<8x1xf32>
    %cst_26 = arith.constant 1.000000e+00 : f32
    %37 = vector.broadcast %cst_26 : f32 to vector<8x1xf32>
    %38 = arith.addf %37, %36 : vector<8x1xf32>
    %39 = tpu.reciprocal %38 {approx = true} : vector<8x1xf32> -> vector<8x1xf32>
    %c0_27 = arith.constant 0 : index
    %c0_28 = arith.constant 0 : index
    %40 = vector.load %arg8[%c0_27, %c0_28] : memref<8x1xf32, #tpu.memory_space<vmem>>, vector<8x1xf32>
    tpu.vector_store %arg8[%c0_27, %c0_28], %39 {strides = array<i32>} : memref<8x1xf32, #tpu.memory_space<vmem>>, vector<8x1xf32>,
    return
  }
  func.func @transform_0(%arg0: i32) -> (i32, i32) {
    %c0_i32 = arith.constant 0 : i32
    %c0_i32_0 = arith.constant 0 : i32
    return %arg0, %c0_i32 : i32, i32
  }
  func.func @transform_1(%arg0: i32) -> (i32, i32) {
    %c0_i32 = arith.constant 0 : i32
    %c0_i32_0 = arith.constant 0 : i32
    %c0_i32_1 = arith.constant 0 : i32
    return %c0_i32, %c0_i32_0 : i32, i32
  }
  func.func @transform_2(%arg0: i32) -> (i32, i32) {
    %c0_i32 = arith.constant 0 : i32
    %c0_i32_0 = arith.constant 0 : i32
    %c0_i32_1 = arith.constant 0 : i32
    return %c0_i32, %c0_i32_0 : i32, i32
  }
  func.func @transform_3(%arg0: i32) -> (i32, i32) {
    %c0_i32 = arith.constant 0 : i32
    %c0_i32_0 = arith.constant 0 : i32
    %c0_i32_1 = arith.constant 0 : i32
    return %c0_i32, %c0_i32_0 : i32, i32
  }
  func.func @transform_4(%arg0: i32) -> (i32, i32) {
    %c0_i32 = arith.constant 0 : i32
    %c0_i32_0 = arith.constant 0 : i32
    %c0_i32_1 = arith.constant 0 : i32
    return %c0_i32, %c0_i32_0 : i32, i32
  }
  func.func @transform_5(%arg0: i32) -> (i32, i32) {
    %c0_i32 = arith.constant 0 : i32
    %c0_i32_0 = arith.constant 0 : i32
    %c0_i32_1 = arith.constant 0 : i32
    return %c0_i32, %c0_i32_0 : i32, i32
  }
  func.func @transform_6(%arg0: i32) -> (i32, i32) {
    %c0_i32 = arith.constant 0 : i32
    %c0_i32_0 = arith.constant 0 : i32
    %c0_i32_1 = arith.constant 0 : i32
    return %c0_i32, %c0_i32_0 : i32, i32
  }
  func.func @transform_7(%arg0: i32) -> (i32, i32) {
    %c0_i32 = arith.constant 0 : i32
    %c0_i32_0 = arith.constant 0 : i32
    return %arg0, %c0_i32 : i32, i32
  }
}

</mosaic_0001>

<llo_original>
// kernel: tpu_custom_call.1
$region0: #{tpu_custom_call.1}
  #allocation0 [shape = 'u32[]', space=smem, size = 0x4, offset = 0x4, fixed_abs, tag = 'smem constant byte address 0x4 - core index']
  #allocation1 [shape = 'u32[144,128]{1,0:T(1,128)}', space=vmem, size = 0x12000, scoped, tag = 'internal scratch']
  #allocation2 [shape = 'bf16[8,896]{1,0:T(8,128)(2,1)}', space=vmem, size = 0x3800, scoped, tag = 'scratch operand']
  %s0 = inlined_call_operand.hbm [shape: f32[8,784], index: 0, kind: input, shape index: {}]
  %s1 = inlined_call_operand.hbm [shape: bf16[896,512], index: 1, kind: input, shape index: {}]
  %s2 = inlined_call_operand.vmem [shape: f32[1,512], index: 2, kind: input, shape index: {}]
  %s3 = inlined_call_operand.hbm [shape: bf16[512,256], index: 3, kind: input, shape index: {}]
  %s4 = inlined_call_operand.vmem [shape: f32[1,256], index: 4, kind: input, shape index: {}]
  %s5 = inlined_call_operand.hbm [shape: bf16[256,128], index: 5, kind: input, shape index: {}]
  %s6 = inlined_call_operand.vmem [shape: f32[1,128], index: 6, kind: input, shape index: {}]
  %s7 = inlined_call_operand.vmem [shape: f32[8,1], index: 7, kind: output, shape index: {}]
  %s8 = sld [smem:[#allocation0]]
  $region54: #{tpu_custom_call.1} parent=0
    _
  %s10 = ssub.s32 1, %s8
  %s11 = scalar_select 0, %s10, %s8
  $region1: #{tpu_custom_call.1} parent=0
    #allocation3 [shape = 'u8[28672]{0}', space=vmem, size = 0x7000, scoped, tag = 'input window, operand 0, single buffered']
    #allocation4 [shape = 's32[1]{0}', space=sflag, size = 0x4, scoped, tag = 'scoped memory for tpu_custom_call.1']
    #allocation5 [shape = 'u8[917504]{0}', space=vmem, size = 0xe0000, scoped, tag = 'input window, operand 1, single buffered']
    #allocation6 [shape = 's32[1]{0}', space=sflag, size = 0x4, scoped, tag = 'scoped memory for tpu_custom_call.1']
    #allocation7 [shape = 'u8[262144]{0}', space=vmem, size = 0x40000, scoped, tag = 'input window, operand 3, single buffered']
    #allocation8 [shape = 'u8[65536]{0}', space=vmem, size = 0x10000, scoped, tag = 'input window, operand 5, single buffered']
    #allocation9 [shape = 's32[1]{0}', space=sflag, size = 0x4, scoped, tag = 'scoped memory for tpu_custom_call.1']
    %12 = vsyncpa [#allocation4], 0
    %13 = vsyncpa [#allocation6], 0
    %14 = vsyncpa [#allocation9], 0
    // Predicated region
    $region2: #{tpu_custom_call.1} parent=1 // pred_check
      _
    $region3: #{tpu_custom_call.1} parent=1 // pred_check_branch
      %16 = sbr.rel (0) target = $region5
    $region4: #{tpu_custom_call.1} parent=1 // pred_region
      %s18 = ssub.s32 896, 896
      %19 = vsyncadd [#allocation4], %s18
      %s21 = sshll.u32 [#allocation3], 4
      %s22 = int_to_ptr.vmem [resolvable:$true] %s21
      %24 = dma.hbm_to_vmem [thread:$0]  %s0, 896, %s22, [#allocation4]
    $region5: #{tpu_custom_call.1} parent=1 // pred_fallthru
      _
    // Predicated region
    $region6: #{tpu_custom_call.1} parent=1 // pred_check
      _
    $region7: #{tpu_custom_call.1} parent=1 // pred_check_branch
      %26 = sbr.rel (0) target = $region9
    $region8: #{tpu_custom_call.1} parent=1 // pred_region
      %s28 = ssub.s32 28672, 28672
      %29 = vsyncadd [#allocation6], %s28
      %s30 = sshll.u32 [#allocation5], 4
      %s31 = int_to_ptr.vmem [resolvable:$true] %s30
      %36 = dma.hbm_to_vmem [thread:$0]  %s1, 28672, %s31, [#allocation6], 256, 256, 16
    $region9: #{tpu_custom_call.1} parent=1 // pred_fallthru
      _
    // Predicated region
    $region10: #{tpu_custom_call.1} parent=1 // pred_check
      _
    $region11: #{tpu_custom_call.1} parent=1 // pred_check_branch
      %38 = sbr.rel (0) target = $region13
    $region12: #{tpu_custom_call.1} parent=1 // pred_region
      _
    $region13: #{tpu_custom_call.1} parent=1 // pred_fallthru
      _
    // Predicated region
    $region14: #{tpu_custom_call.1} parent=1 // pred_check
      _
    $region15: #{tpu_custom_call.1} parent=1 // pred_check_branch
      %40 = sbr.rel (0) target = $region17
    $region16: #{tpu_custom_call.1} parent=1 // pred_region
      %s42 = ssub.s32 8192, 8192
      %43 = vsyncadd [#allocation6], %s42
      %s44 = sshll.u32 [#allocation7], 4
      %s45 = int_to_ptr.vmem [resolvable:$true] %s44
      %50 = dma.hbm_to_vmem [thread:$0]  %s3, 8192, %s45, [#allocation6], 128, 128, 8
    $region17: #{tpu_custom_call.1} parent=1 // pred_fallthru
      _
    // Predicated region
    $region18: #{tpu_custom_call.1} parent=1 // pred_check
      _
    $region19: #{tpu_custom_call.1} parent=1 // pred_check_branch
      %52 = sbr.rel (0) target = $region21
    $region20: #{tpu_custom_call.1} parent=1 // pred_region
      _
    $region21: #{tpu_custom_call.1} parent=1 // pred_fallthru
      _
    // Predicated region
    $region22: #{tpu_custom_call.1} parent=1 // pred_check
      _
    $region23: #{tpu_custom_call.1} parent=1 // pred_check_branch
      %54 = sbr.rel (0) target = $region25
    $region24: #{tpu_custom_call.1} parent=1 // pred_region
      %s56 = ssub.s32 2048, 2048
      %57 = vsyncadd [#allocation9], %s56
      %s58 = sshll.u32 [#allocation8], 4
      %s59 = int_to_ptr.vmem [resolvable:$true] %s58
      %64 = dma.hbm_to_vmem [thread:$0]  %s5, 2048, %s59, [#allocation9], 64, 64, 4
    $region25: #{tpu_custom_call.1} parent=1 // pred_fallthru
      _
    // Predicated region
    $region26: #{tpu_custom_call.1} parent=1 // pred_check
      _
    $region27: #{tpu_custom_call.1} parent=1 // pred_check_branch
      %66 = sbr.rel (0) target = $region29
    $region28: #{tpu_custom_call.1} parent=1 // pred_region
      _
    $region29: #{tpu_custom_call.1} parent=1 // pred_fallthru
      _
    // Predicated region
    $region30: #{tpu_custom_call.1} parent=1 // pred_check
      _
    $region31: #{tpu_custom_call.1} parent=1 // pred_check_branch
      %68 = sbr.rel (0) target = $region33
    $region32: #{tpu_custom_call.1} parent=1 // pred_region
      %69 = dma.done [#allocation4], 896
    $region33: #{tpu_custom_call.1} parent=1 // pred_fallthru
      _
    // Predicated region
    $region34: #{tpu_custom_call.1} parent=1 // pred_check
      _
    $region35: #{tpu_custom_call.1} parent=1 // pred_check_branch
      %71 = sbr.rel (0) target = $region37
    $region36: #{tpu_custom_call.1} parent=1 // pred_region
      %72 = dma.done [#allocation6], 28672
    $region37: #{tpu_custom_call.1} parent=1 // pred_fallthru
      _
    // Predicated region
    $region38: #{tpu_custom_call.1} parent=1 // pred_check
      _
    $region39: #{tpu_custom_call.1} parent=1 // pred_check_branch
      %74 = sbr.rel (0) target = $region41
    $region40: #{tpu_custom_call.1} parent=1 // pred_region
      %75 = dma.done [#allocation6], 8192
    $region41: #{tpu_custom_call.1} parent=1 // pred_fallthru
      _
    // Predicated region
    $region42: #{tpu_custom_call.1} parent=1 // pred_check
      _
    $region43: #{tpu_custom_call.1} parent=1 // pred_check_branch
      %77 = sbr.rel (0) target = $region45
    $region44: #{tpu_custom_call.1} parent=1 // pred_region
      %78 = dma.done [#allocation9], 2048
    $region45: #{tpu_custom_call.1} parent=1 // pred_fallthru
      _
    %80 = vst [vmem:[#allocation2 + $0x18] sm:$0xf] 0
    %v81 = vld [vmem:[#allocation3] sm:$0xff]
    %v82 = vld [vmem:[#allocation3 + $0x8] sm:$0xff]
    %v83 = vld [vmem:[#allocation3 + $0x10] sm:$0xff]
    %v84 = vld [vmem:[#allocation3 + $0x18] sm:$0xff]
    %v85 = vld [vmem:[#allocation3 + $0x20] sm:$0xff]
    %v86 = vld [vmem:[#allocation3 + $0x28] sm:$0xff]
    %v87 = vld [vmem:[#allocation3 + $0x30] sm:$0xff]
    %v88 = vpack.c.bf16 %v81, %v81
    %v89 = vpack.c.bf16 %v82, %v82
    %v90 = vpack.c.bf16 %v83, %v83
    %v91 = vpack.c.bf16 %v84, %v84
    %v92 = vpack.c.bf16 %v85, %v85
    %v93 = vpack.c.bf16 %v86, %v86
    %v94 = vpack.c.bf16 %v87, %v87
    %v102 = vunpack.c.l.b16 %v88
    %v103 = vunpack.c.l.b16 %v89
    %v104 = vunpack.c.l.b16 %v90
    %v105 = vunpack.c.l.b16 %v91
    %v106 = vunpack.c.l.b16 %v92
    %v107 = vunpack.c.l.b16 %v93
    %v108 = vunpack.c.l.b16 %v94
    %v109 = vpack.c.b16 %v103, %v102
    %v110 = vpack.c.b16 %v105, %v104
    %v111 = vpack.c.b16 %v107, %v106
    %v112 = vpack.c.b16 %v108, %v108
    %117 = vst [vmem:[#allocation2] sm:$0xff] %v109
    %118 = vst [vmem:[#allocation2 + $0x8] sm:$0xff] %v110
    %119 = vst [vmem:[#allocation2 + $0x10] sm:$0xff] %v111
    %vm120 = vcmask 125952
    %121 = vst.msk [vmem:[#allocation2 + $0x18] sm:$0xf] %vm120, %v112
    %v122 = vld [vmem:[#allocation2] sm:$0xff]
    %v123 = vld [vmem:[#allocation2 + $0x8] sm:$0xff]
    %v124 = vld [vmem:[#allocation2 + $0x10] sm:$0xff]
    %v125 = vld [vmem:[#allocation2 + $0x18] sm:$0xf]
    %v126 = vld [vmem:[#allocation5] sm:$0xff]
    %v127 = vld [vmem:[#allocation5 + $0x8] sm:$0xff]
    %v128 = vld [vmem:[#allocation5 + $0x10] sm:$0xff]
    %v129 = vld [vmem:[#allocation5 + $0x18] sm:$0xff]
    %v130 = vld [vmem:[#allocation5 + $0x20] sm:$0xff]
    %v131 = vld [vmem:[#allocation5 + $0x28] sm:$0xff]
    %v132 = vld [vmem:[#allocation5 + $0x30] sm:$0xff]
    %v133 = vld [vmem:[#allocation5 + $0x38] sm:$0xff]
    %v134 = vld [vmem:[#allocation5 + $0x40] sm:$0xff]
    %v135 = vld [vmem:[#allocation5 + $0x48] sm:$0xff]
    %v136 = vld [vmem:[#allocation5 + $0x50] sm:$0xff]
    %v137 = vld [vmem:[#allocation5 + $0x58] sm:$0xff]
    %v138 = vld [vmem:[#allocation5 + $0x60] sm:$0xff]
    %v139 = vld [vmem:[#allocation5 + $0x68] sm:$0xff]
    %v140 = vld [vmem:[#allocation5 + $0x70] sm:$0xff]
    %v141 = vld [vmem:[#allocation5 + $0x78] sm:$0xff]
    %v142 = vld [vmem:[#allocation5 + $0x80] sm:$0xff]
    %v143 = vld [vmem:[#allocation5 + $0x88] sm:$0xff]
    %v144 = vld [vmem:[#allocation5 + $0x90] sm:$0xff]
    %v145 = vld [vmem:[#allocation5 + $0x98] sm:$0xff]
    %v146 = vld [vmem:[#allocation5 + $0xa0] sm:$0xff]
    %v147 = vld [vmem:[#allocation5 + $0xa8] sm:$0xff]
    %v148 = vld [vmem:[#allocation5 + $0xb0] sm:$0xff]
    %v149 = vld [vmem:[#allocation5 + $0xb8] sm:$0xff]
    %v150 = vld [vmem:[#allocation5 + $0xc0] sm:$0xff]
    %v151 = vld [vmem:[#allocation5 + $0xc8] sm:$0xff]
    %v152 = vld [vmem:[#allocation5 + $0xd0] sm:$0xff]
    %v153 = vld [vmem:[#allocation5 + $0xd8] sm:$0xff]
    %v154 = vld [vmem:[#allocation5 + $0xe0] sm:$0xff]
    %v155 = vld [vmem:[#allocation5 + $0xe8] sm:$0xff]
    %v156 = vld [vmem:[#allocation5 + $0xf0] sm:$0xff]
    %v157 = vld [vmem:[#allocation5 + $0xf8] sm:$0xff]
    %v158 = vld [vmem:[#allocation5 + $0x100] sm:$0xff]
    %v159 = vld [vmem:[#allocation5 + $0x108] sm:$0xff]
    %v160 = vld [vmem:[#allocation5 + $0x110] sm:$0xff]
    %v161 = vld [vmem:[#allocation5 + $0x118] sm:$0xff]
    %v162 = vld [vmem:[#allocation5 + $0x120] sm:$0xff]
    %v163 = vld [vmem:[#allocation5 + $0x128] sm:$0xff]
    %v164 = vld [vmem:[#allocation5 + $0x130] sm:$0xff]
    %v165 = vld [vmem:[#allocation5 + $0x138] sm:$0xff]
    %v166 = vld [vmem:[#allocation5 + $0x140] sm:$0xff]
    %v167 = vld [vmem:[#allocation5 + $0x148] sm:$0xff]
    %v168 = vld [vmem:[#allocation5 + $0x150] sm:$0xff]
    %v169 = vld [vmem:[#allocation5 + $0x158] sm:$0xff]
    %v170 = vld [vmem:[#allocation5 + $0x160] sm:$0xff]
    %v171 = vld [vmem:[#allocation5 + $0x168] sm:$0xff]
    %v172 = vld [vmem:[#allocation5 + $0x170] sm:$0xff]
    %v173 = vld [vmem:[#allocation5 + $0x178] sm:$0xff]
    %v174 = vld [vmem:[#allocation5 + $0x180] sm:$0xff]
    %v175 = vld [vmem:[#allocation5 + $0x188] sm:$0xff]
    %v176 = vld [vmem:[#allocation5 + $0x190] sm:$0xff]
    %v177 = vld [vmem:[#allocation5 + $0x198] sm:$0xff]
    %v178 = vld [vmem:[#allocation5 + $0x1a0] sm:$0xff]
    %v179 = vld [vmem:[#allocation5 + $0x1a8] sm:$0xff]
    %v180 = vld [vmem:[#allocation5 + $0x1b0] sm:$0xff]
    %v181 = vld [vmem:[#allocation5 + $0x1b8] sm:$0xff]
    %v182 = vld [vmem:[#allocation5 + $0x1c0] sm:$0xff]
    %v183 = vld [vmem:[#allocation5 + $0x1c8] sm:$0xff]
    %v184 = vld [vmem:[#allocation5 + $0x1d0] sm:$0xff]
    %v185 = vld [vmem:[#allocation5 + $0x1d8] sm:$0xff]
    %v186 = vld [vmem:[#allocation5 + $0x1e0] sm:$0xff]
    %v187 = vld [vmem:[#allocation5 + $0x1e8] sm:$0xff]
    %v188 = vld [vmem:[#allocation5 + $0x1f0] sm:$0xff]
    %v189 = vld [vmem:[#allocation5 + $0x1f8] sm:$0xff]
    %v190 = vld [vmem:[#allocation5 + $0x200] sm:$0xff]
    %v191 = vld [vmem:[#allocation5 + $0x208] sm:$0xff]
    %v192 = vld [vmem:[#allocation5 + $0x210] sm:$0xff]
    %v193 = vld [vmem:[#allocation5 + $0x218] sm:$0xff]
    %v194 = vld [vmem:[#allocation5 + $0x220] sm:$0xff]
    %v195 = vld [vmem:[#allocation5 + $0x228] sm:$0xff]
    %v196 = vld [vmem:[#allocation5 + $0x230] sm:$0xff]
    %v197 = vld [vmem:[#allocation5 + $0x238] sm:$0xff]
    %v198 = vld [vmem:[#allocation5 + $0x240] sm:$0xff]
    %v199 = vld [vmem:[#allocation5 + $0x248] sm:$0xff]
    %v200 = vld [vmem:[#allocation5 + $0x250] sm:$0xff]
    %v201 = vld [vmem:[#allocation5 + $0x258] sm:$0xff]
    %v202 = vld [vmem:[#allocation5 + $0x260] sm:$0xff]
    %v203 = vld [vmem:[#allocation5 + $0x268] sm:$0xff]
    %v204 = vld [vmem:[#allocation5 + $0x270] sm:$0xff]
    %v205 = vld [vmem:[#allocation5 + $0x278] sm:$0xff]
    %v206 = vld [vmem:[#allocation5 + $0x280] sm:$0xff]
    %v207 = vld [vmem:[#allocation5 + $0x288] sm:$0xff]
    %v208 = vld [vmem:[#allocation5 + $0x290] sm:$0xff]
    %v209 = vld [vmem:[#allocation5 + $0x298] sm:$0xff]
    %v210 = vld [vmem:[#allocation5 + $0x2a0] sm:$0xff]
    %v211 = vld [vmem:[#allocation5 + $0x2a8] sm:$0xff]
    %v212 = vld [vmem:[#allocation5 + $0x2b0] sm:$0xff]
    %v213 = vld [vmem:[#allocation5 + $0x2b8] sm:$0xff]
    %v214 = vld [vmem:[#allocation5 + $0x2c0] sm:$0xff]
    %v215 = vld [vmem:[#allocation5 + $0x2c8] sm:$0xff]
    %v216 = vld [vmem:[#allocation5 + $0x2d0] sm:$0xff]
    %v217 = vld [vmem:[#allocation5 + $0x2d8] sm:$0xff]
    %v218 = vld [vmem:[#allocation5 + $0x2e0] sm:$0xff]
    %v219 = vld [vmem:[#allocation5 + $0x2e8] sm:$0xff]
    %v220 = vld [vmem:[#allocation5 + $0x2f0] sm:$0xff]
    %v221 = vld [vmem:[#allocation5 + $0x2f8] sm:$0xff]
    %v222 = vld [vmem:[#allocation5 + $0x300] sm:$0xff]
    %v223 = vld [vmem:[#allocation5 + $0x308] sm:$0xff]
    %v224 = vld [vmem:[#allocation5 + $0x310] sm:$0xff]
    %v225 = vld [vmem:[#allocation5 + $0x318] sm:$0xff]
    %v226 = vld [vmem:[#allocation5 + $0x320] sm:$0xff]
    %v227 = vld [vmem:[#allocation5 + $0x328] sm:$0xff]
    %v228 = vld [vmem:[#allocation5 + $0x330] sm:$0xff]
    %v229 = vld [vmem:[#allocation5 + $0x338] sm:$0xff]
    %v230 = vld [vmem:[#allocation5 + $0x340] sm:$0xff]
    %v231 = vld [vmem:[#allocation5 + $0x348] sm:$0xff]
    %v232 = vld [vmem:[#allocation5 + $0x350] sm:$0xff]
    %v233 = vld [vmem:[#allocation5 + $0x358] sm:$0xff]
    %v234 = vld [vmem:[#allocation5 + $0x360] sm:$0xff]
    %v235 = vld [vmem:[#allocation5 + $0x368] sm:$0xff]
    %v236 = vld [vmem:[#allocation5 + $0x370] sm:$0xff]
    %v237 = vld [vmem:[#allocation5 + $0x378] sm:$0xff]
    %v238 = vld [vmem:[#allocation5 + $0x380] sm:$0xff]
    %v239 = vld [vmem:[#allocation5 + $0x388] sm:$0xff]
    %v240 = vld [vmem:[#allocation5 + $0x390] sm:$0xff]
    %v241 = vld [vmem:[#allocation5 + $0x398] sm:$0xff]
    %v242 = vld [vmem:[#allocation5 + $0x3a0] sm:$0xff]
    %v243 = vld [vmem:[#allocation5 + $0x3a8] sm:$0xff]
    %v244 = vld [vmem:[#allocation5 + $0x3b0] sm:$0xff]
    %v245 = vld [vmem:[#allocation5 + $0x3b8] sm:$0xff]
    %v246 = vld [vmem:[#allocation5 + $0x3c0] sm:$0xff]
    %v247 = vld [vmem:[#allocation5 + $0x3c8] sm:$0xff]
    %v248 = vld [vmem:[#allocation5 + $0x3d0] sm:$0xff]
    %v249 = vld [vmem:[#allocation5 + $0x3d8] sm:$0xff]
    %v250 = vld [vmem:[#allocation5 + $0x3e0] sm:$0xff]
    %v251 = vld [vmem:[#allocation5 + $0x3e8] sm:$0xff]
    %v252 = vld [vmem:[#allocation5 + $0x3f0] sm:$0xff]
    %v253 = vld [vmem:[#allocation5 + $0x3f8] sm:$0xff]
    %v254 = vld [vmem:[#allocation5 + $0x400] sm:$0xff]
    %v255 = vld [vmem:[#allocation5 + $0x408] sm:$0xff]
    %v256 = vld [vmem:[#allocation5 + $0x410] sm:$0xff]
    %v257 = vld [vmem:[#allocation5 + $0x418] sm:$0xff]
    %v258 = vld [vmem:[#allocation5 + $0x420] sm:$0xff]
    %v259 = vld [vmem:[#allocation5 + $0x428] sm:$0xff]
    %v260 = vld [vmem:[#allocation5 + $0x430] sm:$0xff]
    %v261 = vld [vmem:[#allocation5 + $0x438] sm:$0xff]
    %v262 = vld [vmem:[#allocation5 + $0x440] sm:$0xff]
    %v263 = vld [vmem:[#allocation5 + $0x448] sm:$0xff]
    %v264 = vld [vmem:[#allocation5 + $0x450] sm:$0xff]
    %v265 = vld [vmem:[#allocation5 + $0x458] sm:$0xff]
    %v266 = vld [vmem:[#allocation5 + $0x460] sm:$0xff]
    %v267 = vld [vmem:[#allocation5 + $0x468] sm:$0xff]
    %v268 = vld [vmem:[#allocation5 + $0x470] sm:$0xff]
    %v269 = vld [vmem:[#allocation5 + $0x478] sm:$0xff]
    %v270 = vld [vmem:[#allocation5 + $0x480] sm:$0xff]
    %v271 = vld [vmem:[#allocation5 + $0x488] sm:$0xff]
    %v272 = vld [vmem:[#allocation5 + $0x490] sm:$0xff]
    %v273 = vld [vmem:[#allocation5 + $0x498] sm:$0xff]
    %v274 = vld [vmem:[#allocation5 + $0x4a0] sm:$0xff]
    %v275 = vld [vmem:[#allocation5 + $0x4a8] sm:$0xff]
    %v276 = vld [vmem:[#allocation5 + $0x4b0] sm:$0xff]
    %v277 = vld [vmem:[#allocation5 + $0x4b8] sm:$0xff]
    %v278 = vld [vmem:[#allocation5 + $0x4c0] sm:$0xff]
    %v279 = vld [vmem:[#allocation5 + $0x4c8] sm:$0xff]
    %v280 = vld [vmem:[#allocation5 + $0x4d0] sm:$0xff]
    %v281 = vld [vmem:[#allocation5 + $0x4d8] sm:$0xff]
    %v282 = vld [vmem:[#allocation5 + $0x4e0] sm:$0xff]
    %v283 = vld [vmem:[#allocation5 + $0x4e8] sm:$0xff]
    %v284 = vld [vmem:[#allocation5 + $0x4f0] sm:$0xff]
    %v285 = vld [vmem:[#allocation5 + $0x4f8] sm:$0xff]
    %v286 = vld [vmem:[#allocation5 + $0x500] sm:$0xff]
    %v287 = vld [vmem:[#allocation5 + $0x508] sm:$0xff]
    %v288 = vld [vmem:[#allocation5 + $0x510] sm:$0xff]
    %v289 = vld [vmem:[#allocation5 + $0x518] sm:$0xff]
    %v290 = vld [vmem:[#allocation5 + $0x520] sm:$0xff]
    %v291 = vld [vmem:[#allocation5 + $0x528] sm:$0xff]
    %v292 = vld [vmem:[#allocation5 + $0x530] sm:$0xff]
    %v293 = vld [vmem:[#allocation5 + $0x538] sm:$0xff]
    %v294 = vld [vmem:[#allocation5 + $0x540] sm:$0xff]
    %v295 = vld [vmem:[#allocation5 + $0x548] sm:$0xff]
    %v296 = vld [vmem:[#allocation5 + $0x550] sm:$0xff]
    %v297 = vld [vmem:[#allocation5 + $0x558] sm:$0xff]
    %v298 = vld [vmem:[#allocation5 + $0x560] sm:$0xff]
    %v299 = vld [vmem:[#allocation5 + $0x568] sm:$0xff]
    %v300 = vld [vmem:[#allocation5 + $0x570] sm:$0xff]
    %v301 = vld [vmem:[#allocation5 + $0x578] sm:$0xff]
    %v302 = vld [vmem:[#allocation5 + $0x580] sm:$0xff]
    %v303 = vld [vmem:[#allocation5 + $0x588] sm:$0xff]
    %v304 = vld [vmem:[#allocation5 + $0x590] sm:$0xff]
    %v305 = vld [vmem:[#allocation5 + $0x598] sm:$0xff]
    %v306 = vld [vmem:[#allocation5 + $0x5a0] sm:$0xff]
    %v307 = vld [vmem:[#allocation5 + $0x5a8] sm:$0xff]
    %v308 = vld [vmem:[#allocation5 + $0x5b0] sm:$0xff]
    %v309 = vld [vmem:[#allocation5 + $0x5b8] sm:$0xff]
    %v310 = vld [vmem:[#allocation5 + $0x5c0] sm:$0xff]
    %v311 = vld [vmem:[#allocation5 + $0x5c8] sm:$0xff]
    %v312 = vld [vmem:[#allocation5 + $0x5d0] sm:$0xff]
    %v313 = vld [vmem:[#allocation5 + $0x5d8] sm:$0xff]
    %v314 = vld [vmem:[#allocation5 + $0x5e0] sm:$0xff]
    %v315 = vld [vmem:[#allocation5 + $0x5e8] sm:$0xff]
    %v316 = vld [vmem:[#allocation5 + $0x5f0] sm:$0xff]
    %v317 = vld [vmem:[#allocation5 + $0x5f8] sm:$0xff]
    %v318 = vld [vmem:[#allocation5 + $0x600] sm:$0xff]
    %v319 = vld [vmem:[#allocation5 + $0x608] sm:$0xff]
    %v320 = vld [vmem:[#allocation5 + $0x610] sm:$0xff]
    %v321 = vld [vmem:[#allocation5 + $0x618] sm:$0xff]
    %v322 = vld [vmem:[#allocation5 + $0x620] sm:$0xff]
    %v323 = vld [vmem:[#allocation5 + $0x628] sm:$0xff]
    %v324 = vld [vmem:[#allocation5 + $0x630] sm:$0xff]
    %v325 = vld [vmem:[#allocation5 + $0x638] sm:$0xff]
    %v326 = vld [vmem:[#allocation5 + $0x640] sm:$0xff]
    %v327 = vld [vmem:[#allocation5 + $0x648] sm:$0xff]
    %v328 = vld [vmem:[#allocation5 + $0x650] sm:$0xff]
    %v329 = vld [vmem:[#allocation5 + $0x658] sm:$0xff]
    %v330 = vld [vmem:[#allocation5 + $0x660] sm:$0xff]
    %v331 = vld [vmem:[#allocation5 + $0x668] sm:$0xff]
    %v332 = vld [vmem:[#allocation5 + $0x670] sm:$0xff]
    %v333 = vld [vmem:[#allocation5 + $0x678] sm:$0xff]
    %v334 = vld [vmem:[#allocation5 + $0x680] sm:$0xff]
    %v335 = vld [vmem:[#allocation5 + $0x688] sm:$0xff]
    %v336 = vld [vmem:[#allocation5 + $0x690] sm:$0xff]
    %v337 = vld [vmem:[#allocation5 + $0x698] sm:$0xff]
    %v338 = vld [vmem:[#allocation5 + $0x6a0] sm:$0xff]
    %v339 = vld [vmem:[#allocation5 + $0x6a8] sm:$0xff]
    %v340 = vld [vmem:[#allocation5 + $0x6b0] sm:$0xff]
    %v341 = vld [vmem:[#allocation5 + $0x6b8] sm:$0xff]
    %v342 = vld [vmem:[#allocation5 + $0x6c0] sm:$0xff]
    %v343 = vld [vmem:[#allocation5 + $0x6c8] sm:$0xff]
    %v344 = vld [vmem:[#allocation5 + $0x6d0] sm:$0xff]
    %v345 = vld [vmem:[#allocation5 + $0x6d8] sm:$0xff]
    %v346 = vld [vmem:[#allocation5 + $0x6e0] sm:$0xff]
    %v347 = vld [vmem:[#allocation5 + $0x6e8] sm:$0xff]
    %v348 = vld [vmem:[#allocation5 + $0x6f0] sm:$0xff]
    %v349 = vld [vmem:[#allocation5 + $0x6f8] sm:$0xff]
    %v350 = vld [vmem:[%s2] sm:$0xf]
    %v352 = vlaneseq
    %v353 = vshrl.u32 %v352, 7
    %v354 = vsub.s32 0, %v353
    %v355 = vrot.slane %v350, %v354
    %v356 = vlaneseq
    %v357 = vshrl.u32 %v356, 7
    %v358 = vsub.s32 1, %v357
    %v359 = vrot.slane %v350, %v358
    %v360 = vlaneseq
    %v361 = vshrl.u32 %v360, 7
    %v362 = vsub.s32 2, %v361
    %v363 = vrot.slane %v350, %v362
    %v364 = vlaneseq
    %v365 = vshrl.u32 %v364, 7
    %v366 = vsub.s32 3, %v365
    %v367 = vrot.slane %v350, %v366
    %v376 = vunpack.c.l.b16 %v122
    %v377 = vunpack.c.h.b16 %v122
    %v378 = vunpack.c.l.b16 %v123
    %v379 = vunpack.c.h.b16 %v123
    %v380 = vunpack.c.l.b16 %v124
    %v381 = vunpack.c.h.b16 %v124
    %v382 = vunpack.c.l.b16 %v125
    %v383 = vpack.c.b16 %v376, %v376
    %v384 = vpack.c.b16 %v377, %v377
    %v385 = vpack.c.b16 %v378, %v378
    %v386 = vpack.c.b16 %v379, %v379
    %v387 = vpack.c.b16 %v380, %v380
    %v388 = vpack.c.b16 %v381, %v381
    %v389 = vpack.c.b16 %v382, %v382
    %v621 = vunpack.c.l.b16 %v126
    %v622 = vunpack.c.h.b16 %v126
    %v623 = vunpack.c.l.b16 %v127
    %v624 = vunpack.c.h.b16 %v127
    %v625 = vunpack.c.l.b16 %v128
    %v626 = vunpack.c.h.b16 %v128
    %v627 = vunpack.c.l.b16 %v129
    %v628 = vunpack.c.h.b16 %v129
    %v629 = vunpack.c.l.b16 %v130
    %v630 = vunpack.c.h.b16 %v130
    %v631 = vunpack.c.l.b16 %v131
    %v632 = vunpack.c.h.b16 %v131
    %v633 = vunpack.c.l.b16 %v132
    %v634 = vunpack.c.h.b16 %v132
    %v635 = vunpack.c.l.b16 %v133
    %v636 = vunpack.c.h.b16 %v133
    %v637 = vunpack.c.l.b16 %v134
    %v638 = vunpack.c.h.b16 %v134
    %v639 = vunpack.c.l.b16 %v135
    %v640 = vunpack.c.h.b16 %v135
    %v641 = vunpack.c.l.b16 %v136
    %v642 = vunpack.c.h.b16 %v136
    %v643 = vunpack.c.l.b16 %v137
    %v644 = vunpack.c.h.b16 %v137
    %v645 = vunpack.c.l.b16 %v138
    %v646 = vunpack.c.h.b16 %v138
    %v647 = vunpack.c.l.b16 %v139
    %v648 = vunpack.c.h.b16 %v139
    %v649 = vunpack.c.l.b16 %v140
    %v650 = vunpack.c.h.b16 %v140
    %v651 = vunpack.c.l.b16 %v141
    %v652 = vunpack.c.h.b16 %v141
    %v653 = vunpack.c.l.b16 %v142
    %v654 = vunpack.c.h.b16 %v142
    %v655 = vunpack.c.l.b16 %v143
    %v656 = vunpack.c.h.b16 %v143
    %v657 = vunpack.c.l.b16 %v144
    %v658 = vunpack.c.h.b16 %v144
    %v659 = vunpack.c.l.b16 %v145
    %v660 = vunpack.c.h.b16 %v145
    %v661 = vunpack.c.l.b16 %v146
    %v662 = vunpack.c.h.b16 %v146
    %v663 = vunpack.c.l.b16 %v147
    %v664 = vunpack.c.h.b16 %v147
    %v665 = vunpack.c.l.b16 %v148
    %v666 = vunpack.c.h.b16 %v148
    %v667 = vunpack.c.l.b16 %v149
    %v668 = vunpack.c.h.b16 %v149
    %v669 = vunpack.c.l.b16 %v150
    %v670 = vunpack.c.h.b16 %v150
    %v671 = vunpack.c.l.b16 %v151
    %v672 = vunpack.c.h.b16 %v151
    %v673 = vunpack.c.l.b16 %v152
    %v674 = vunpack.c.h.b16 %v152
    %v675 = vunpack.c.l.b16 %v153
    %v676 = vunpack.c.h.b16 %v153
    %v677 = vunpack.c.l.b16 %v154
    %v678 = vunpack.c.h.b16 %v154
    %v679 = vunpack.c.l.b16 %v155
    %v680 = vunpack.c.h.b16 %v155
    %v681 = vunpack.c.l.b16 %v156
    %v682 = vunpack.c.h.b16 %v156
    %v683 = vunpack.c.l.b16 %v157
    %v684 = vunpack.c.h.b16 %v157
    %v685 = vunpack.c.l.b16 %v158
    %v686 = vunpack.c.h.b16 %v158
    %v687 = vunpack.c.l.b16 %v159
    %v688 = vunpack.c.h.b16 %v159
    %v689 = vunpack.c.l.b16 %v160
    %v690 = vunpack.c.h.b16 %v160
    %v691 = vunpack.c.l.b16 %v161
    %v692 = vunpack.c.h.b16 %v161
    %v693 = vunpack.c.l.b16 %v162
    %v694 = vunpack.c.h.b16 %v162
    %v695 = vunpack.c.l.b16 %v163
    %v696 = vunpack.c.h.b16 %v163
    %v697 = vunpack.c.l.b16 %v164
    %v698 = vunpack.c.h.b16 %v164
    %v699 = vunpack.c.l.b16 %v165
    %v700 = vunpack.c.h.b16 %v165
    %v701 = vunpack.c.l.b16 %v166
    %v702 = vunpack.c.h.b16 %v166
    %v703 = vunpack.c.l.b16 %v167
    %v704 = vunpack.c.h.b16 %v167
    %v705 = vunpack.c.l.b16 %v168
    %v706 = vunpack.c.h.b16 %v168
    %v707 = vunpack.c.l.b16 %v169
    %v708 = vunpack.c.h.b16 %v169
    %v709 = vunpack.c.l.b16 %v170
    %v710 = vunpack.c.h.b16 %v170
    %v711 = vunpack.c.l.b16 %v171
    %v712 = vunpack.c.h.b16 %v171
    %v713 = vunpack.c.l.b16 %v172
    %v714 = vunpack.c.h.b16 %v172
    %v715 = vunpack.c.l.b16 %v173
    %v716 = vunpack.c.h.b16 %v173
    %v717 = vunpack.c.l.b16 %v174
    %v718 = vunpack.c.h.b16 %v174
    %v719 = vunpack.c.l.b16 %v175
    %v720 = vunpack.c.h.b16 %v175
    %v721 = vunpack.c.l.b16 %v176
    %v722 = vunpack.c.h.b16 %v176
    %v723 = vunpack.c.l.b16 %v177
    %v724 = vunpack.c.h.b16 %v177
    %v725 = vunpack.c.l.b16 %v178
    %v726 = vunpack.c.h.b16 %v178
    %v727 = vunpack.c.l.b16 %v179
    %v728 = vunpack.c.h.b16 %v179
    %v729 = vunpack.c.l.b16 %v180
    %v730 = vunpack.c.h.b16 %v180
    %v731 = vunpack.c.l.b16 %v181
    %v732 = vunpack.c.h.b16 %v181
    %v733 = vunpack.c.l.b16 %v182
    %v734 = vunpack.c.h.b16 %v182
    %v735 = vunpack.c.l.b16 %v183
    %v736 = vunpack.c.h.b16 %v183
    %v737 = vunpack.c.l.b16 %v184
    %v738 = vunpack.c.h.b16 %v184
    %v739 = vunpack.c.l.b16 %v185
    %v740 = vunpack.c.h.b16 %v185
    %v741 = vunpack.c.l.b16 %v186
    %v742 = vunpack.c.h.b16 %v186
    %v743 = vunpack.c.l.b16 %v187
    %v744 = vunpack.c.h.b16 %v187
    %v745 = vunpack.c.l.b16 %v188
    %v746 = vunpack.c.h.b16 %v188
    %v747 = vunpack.c.l.b16 %v189
    %v748 = vunpack.c.h.b16 %v189
    %v749 = vunpack.c.l.b16 %v190
    %v750 = vunpack.c.h.b16 %v190
    %v751 = vunpack.c.l.b16 %v191
    %v752 = vunpack.c.h.b16 %v191
    %v753 = vunpack.c.l.b16 %v192
    %v754 = vunpack.c.h.b16 %v192
    %v755 = vunpack.c.l.b16 %v193
    %v756 = vunpack.c.h.b16 %v193
    %v757 = vunpack.c.l.b16 %v194
    %v758 = vunpack.c.h.b16 %v194
    %v759 = vunpack.c.l.b16 %v195
    %v760 = vunpack.c.h.b16 %v195
    %v761 = vunpack.c.l.b16 %v196
    %v762 = vunpack.c.h.b16 %v196
    %v763 = vunpack.c.l.b16 %v197
    %v764 = vunpack.c.h.b16 %v197
    %v765 = vunpack.c.l.b16 %v198
    %v766 = vunpack.c.h.b16 %v198
    %v767 = vunpack.c.l.b16 %v199
    %v768 = vunpack.c.h.b16 %v199
    %v769 = vunpack.c.l.b16 %v200
    %v770 = vunpack.c.h.b16 %v200
    %v771 = vunpack.c.l.b16 %v201
    %v772 = vunpack.c.h.b16 %v201
    %v773 = vunpack.c.l.b16 %v202
    %v774 = vunpack.c.h.b16 %v202
    %v775 = vunpack.c.l.b16 %v203
    %v776 = vunpack.c.h.b16 %v203
    %v777 = vunpack.c.l.b16 %v204
    %v778 = vunpack.c.h.b16 %v204
    %v779 = vunpack.c.l.b16 %v205
    %v780 = vunpack.c.h.b16 %v205
    %v781 = vunpack.c.l.b16 %v206
    %v782 = vunpack.c.h.b16 %v206
    %v783 = vunpack.c.l.b16 %v207
    %v784 = vunpack.c.h.b16 %v207
    %v785 = vunpack.c.l.b16 %v208
    %v786 = vunpack.c.h.b16 %v208
    %v787 = vunpack.c.l.b16 %v209
    %v788 = vunpack.c.h.b16 %v209
    %v789 = vunpack.c.l.b16 %v210
    %v790 = vunpack.c.h.b16 %v210
    %v791 = vunpack.c.l.b16 %v211
    %v792 = vunpack.c.h.b16 %v211
    %v793 = vunpack.c.l.b16 %v212
    %v794 = vunpack.c.h.b16 %v212
    %v795 = vunpack.c.l.b16 %v213
    %v796 = vunpack.c.h.b16 %v213
    %v797 = vunpack.c.l.b16 %v214
    %v798 = vunpack.c.h.b16 %v214
    %v799 = vunpack.c.l.b16 %v215
    %v800 = vunpack.c.h.b16 %v215
    %v801 = vunpack.c.l.b16 %v216
    %v802 = vunpack.c.h.b16 %v216
    %v803 = vunpack.c.l.b16 %v217
    %v804 = vunpack.c.h.b16 %v217
    %v805 = vunpack.c.l.b16 %v218
    %v806 = vunpack.c.h.b16 %v218
    %v807 = vunpack.c.l.b16 %v219
    %v808 = vunpack.c.h.b16 %v219
    %v809 = vunpack.c.l.b16 %v220
    %v810 = vunpack.c.h.b16 %v220
    %v811 = vunpack.c.l.b16 %v221
    %v812 = vunpack.c.h.b16 %v221
    %v813 = vunpack.c.l.b16 %v222
    %v814 = vunpack.c.h.b16 %v222
    %v815 = vunpack.c.l.b16 %v223
    %v816 = vunpack.c.h.b16 %v223
    %v817 = vunpack.c.l.b16 %v224
    %v818 = vunpack.c.h.b16 %v224
    %v819 = vunpack.c.l.b16 %v225
    %v820 = vunpack.c.h.b16 %v225
    %v821 = vunpack.c.l.b16 %v226
    %v822 = vunpack.c.h.b16 %v226
    %v823 = vunpack.c.l.b16 %v227
    %v824 = vunpack.c.h.b16 %v227
    %v825 = vunpack.c.l.b16 %v228
    %v826 = vunpack.c.h.b16 %v228
    %v827 = vunpack.c.l.b16 %v229
    %v828 = vunpack.c.h.b16 %v229
    %v829 = vunpack.c.l.b16 %v230
    %v830 = vunpack.c.h.b16 %v230
    %v831 = vunpack.c.l.b16 %v231
    %v832 = vunpack.c.h.b16 %v231
    %v833 = vunpack.c.l.b16 %v232
    %v834 = vunpack.c.h.b16 %v232
    %v835 = vunpack.c.l.b16 %v233
    %v836 = vunpack.c.h.b16 %v233
    %v837 = vunpack.c.l.b16 %v234
    %v838 = vunpack.c.h.b16 %v234
    %v839 = vunpack.c.l.b16 %v235
    %v840 = vunpack.c.h.b16 %v235
    %v841 = vunpack.c.l.b16 %v236
    %v842 = vunpack.c.h.b16 %v236
    %v843 = vunpack.c.l.b16 %v237
    %v844 = vunpack.c.h.b16 %v237
    %v845 = vunpack.c.l.b16 %v238
    %v846 = vunpack.c.h.b16 %v238
    %v847 = vunpack.c.l.b16 %v239
    %v848 = vunpack.c.h.b16 %v239
    %v849 = vunpack.c.l.b16 %v240
    %v850 = vunpack.c.h.b16 %v240
    %v851 = vunpack.c.l.b16 %v241
    %v852 = vunpack.c.h.b16 %v241
    %v853 = vunpack.c.l.b16 %v242
    %v854 = vunpack.c.h.b16 %v242
    %v855 = vunpack.c.l.b16 %v243
    %v856 = vunpack.c.h.b16 %v243
    %v857 = vunpack.c.l.b16 %v244
    %v858 = vunpack.c.h.b16 %v244
    %v859 = vunpack.c.l.b16 %v245
    %v860 = vunpack.c.h.b16 %v245
    %v861 = vunpack.c.l.b16 %v246
    %v862 = vunpack.c.h.b16 %v246
    %v863 = vunpack.c.l.b16 %v247
    %v864 = vunpack.c.h.b16 %v247
    %v865 = vunpack.c.l.b16 %v248
    %v866 = vunpack.c.h.b16 %v248
    %v867 = vunpack.c.l.b16 %v249
    %v868 = vunpack.c.h.b16 %v249
    %v869 = vunpack.c.l.b16 %v250
    %v870 = vunpack.c.h.b16 %v250
    %v871 = vunpack.c.l.b16 %v251
    %v872 = vunpack.c.h.b16 %v251
    %v873 = vunpack.c.l.b16 %v252
    %v874 = vunpack.c.h.b16 %v252
    %v875 = vunpack.c.l.b16 %v253
    %v876 = vunpack.c.h.b16 %v253
    %v877 = vunpack.c.l.b16 %v254
    %v878 = vunpack.c.h.b16 %v254
    %v879 = vunpack.c.l.b16 %v255
    %v880 = vunpack.c.h.b16 %v255
    %v881 = vunpack.c.l.b16 %v256
    %v882 = vunpack.c.h.b16 %v256
    %v883 = vunpack.c.l.b16 %v257
    %v884 = vunpack.c.h.b16 %v257
    %v885 = vunpack.c.l.b16 %v258
    %v886 = vunpack.c.h.b16 %v258
    %v887 = vunpack.c.l.b16 %v259
    %v888 = vunpack.c.h.b16 %v259
    %v889 = vunpack.c.l.b16 %v260
    %v890 = vunpack.c.h.b16 %v260
    %v891 = vunpack.c.l.b16 %v261
    %v892 = vunpack.c.h.b16 %v261
    %v893 = vunpack.c.l.b16 %v262
    %v894 = vunpack.c.h.b16 %v262
    %v895 = vunpack.c.l.b16 %v263
    %v896 = vunpack.c.h.b16 %v263
    %v897 = vunpack.c.l.b16 %v264
    %v898 = vunpack.c.h.b16 %v264
    %v899 = vunpack.c.l.b16 %v265
    %v900 = vunpack.c.h.b16 %v265
    %v901 = vunpack.c.l.b16 %v266
    %v902 = vunpack.c.h.b16 %v266
    %v903 = vunpack.c.l.b16 %v267
    %v904 = vunpack.c.h.b16 %v267
    %v905 = vunpack.c.l.b16 %v268
    %v906 = vunpack.c.h.b16 %v268
    %v907 = vunpack.c.l.b16 %v269
    %v908 = vunpack.c.h.b16 %v269
    %v909 = vunpack.c.l.b16 %v270
    %v910 = vunpack.c.h.b16 %v270
    %v911 = vunpack.c.l.b16 %v271
    %v912 = vunpack.c.h.b16 %v271
    %v913 = vunpack.c.l.b16 %v272
    %v914 = vunpack.c.h.b16 %v272
    %v915 = vunpack.c.l.b16 %v273
    %v916 = vunpack.c.h.b16 %v273
    %v917 = vunpack.c.l.b16 %v274
    %v918 = vunpack.c.h.b16 %v274
    %v919 = vunpack.c.l.b16 %v275
    %v920 = vunpack.c.h.b16 %v275
    %v921 = vunpack.c.l.b16 %v276
    %v922 = vunpack.c.h.b16 %v276
    %v923 = vunpack.c.l.b16 %v277
    %v924 = vunpack.c.h.b16 %v277
    %v925 = vunpack.c.l.b16 %v278
    %v926 = vunpack.c.h.b16 %v278
    %v927 = vunpack.c.l.b16 %v279
    %v928 = vunpack.c.h.b16 %v279
    %v929 = vunpack.c.l.b16 %v280
    %v930 = vunpack.c.h.b16 %v280
    %v931 = vunpack.c.l.b16 %v281
    %v932 = vunpack.c.h.b16 %v281
    %v933 = vunpack.c.l.b16 %v282
    %v934 = vunpack.c.h.b16 %v282
    %v935 = vunpack.c.l.b16 %v283
    %v936 = vunpack.c.h.b16 %v283
    %v937 = vunpack.c.l.b16 %v284
    %v938 = vunpack.c.h.b16 %v284
    %v939 = vunpack.c.l.b16 %v285
    %v940 = vunpack.c.h.b16 %v285
    %v941 = vunpack.c.l.b16 %v286
    %v942 = vunpack.c.h.b16 %v286
    %v943 = vunpack.c.l.b16 %v287
    %v944 = vunpack.c.h.b16 %v287
    %v945 = vunpack.c.l.b16 %v288
    %v946 = vunpack.c.h.b16 %v288
    %v947 = vunpack.c.l.b16 %v289
    %v948 = vunpack.c.h.b16 %v289
    %v949 = vunpack.c.l.b16 %v290
    %v950 = vunpack.c.h.b16 %v290
    %v951 = vunpack.c.l.b16 %v291
    %v952 = vunpack.c.h.b16 %v291
    %v953 = vunpack.c.l.b16 %v292
    %v954 = vunpack.c.h.b16 %v292
    %v955 = vunpack.c.l.b16 %v293
    %v956 = vunpack.c.h.b16 %v293
    %v957 = vunpack.c.l.b16 %v294
    %v958 = vunpack.c.h.b16 %v294
    %v959 = vunpack.c.l.b16 %v295
    %v960 = vunpack.c.h.b16 %v295
    %v961 = vunpack.c.l.b16 %v296
    %v962 = vunpack.c.h.b16 %v296
    %v963 = vunpack.c.l.b16 %v297
    %v964 = vunpack.c.h.b16 %v297
    %v965 = vunpack.c.l.b16 %v298
    %v966 = vunpack.c.h.b16 %v298
    %v967 = vunpack.c.l.b16 %v299
    %v968 = vunpack.c.h.b16 %v299
    %v969 = vunpack.c.l.b16 %v300
    %v970 = vunpack.c.h.b16 %v300
    %v971 = vunpack.c.l.b16 %v301
    %v972 = vunpack.c.h.b16 %v301
    %v973 = vunpack.c.l.b16 %v302
    %v974 = vunpack.c.h.b16 %v302
    %v975 = vunpack.c.l.b16 %v303
    %v976 = vunpack.c.h.b16 %v303
    %v977 = vunpack.c.l.b16 %v304
    %v978 = vunpack.c.h.b16 %v304
    %v979 = vunpack.c.l.b16 %v305
    %v980 = vunpack.c.h.b16 %v305
    %v981 = vunpack.c.l.b16 %v306
    %v982 = vunpack.c.h.b16 %v306
    %v983 = vunpack.c.l.b16 %v307
    %v984 = vunpack.c.h.b16 %v307
    %v985 = vunpack.c.l.b16 %v308
    %v986 = vunpack.c.h.b16 %v308
    %v987 = vunpack.c.l.b16 %v309
    %v988 = vunpack.c.h.b16 %v309
    %v989 = vunpack.c.l.b16 %v310
    %v990 = vunpack.c.h.b16 %v310
    %v991 = vunpack.c.l.b16 %v311
    %v992 = vunpack.c.h.b16 %v311
    %v993 = vunpack.c.l.b16 %v312
    %v994 = vunpack.c.h.b16 %v312
    %v995 = vunpack.c.l.b16 %v313
    %v996 = vunpack.c.h.b16 %v313
    %v997 = vunpack.c.l.b16 %v314
    %v998 = vunpack.c.h.b16 %v314
    %v999 = vunpack.c.l.b16 %v315
    %v1000 = vunpack.c.h.b16 %v315
    %v1001 = vunpack.c.l.b16 %v316
    %v1002 = vunpack.c.h.b16 %v316
    %v1003 = vunpack.c.l.b16 %v317
    %v1004 = vunpack.c.h.b16 %v317
    %v1005 = vunpack.c.l.b16 %v318
    %v1006 = vunpack.c.h.b16 %v318
    %v1007 = vunpack.c.l.b16 %v319
    %v1008 = vunpack.c.h.b16 %v319
    %v1009 = vunpack.c.l.b16 %v320
    %v1010 = vunpack.c.h.b16 %v320
    %v1011 = vunpack.c.l.b16 %v321
    %v1012 = vunpack.c.h.b16 %v321
    %v1013 = vunpack.c.l.b16 %v322
    %v1014 = vunpack.c.h.b16 %v322
    %v1015 = vunpack.c.l.b16 %v323
    %v1016 = vunpack.c.h.b16 %v323
    %v1017 = vunpack.c.l.b16 %v324
    %v1018 = vunpack.c.h.b16 %v324
    %v1019 = vunpack.c.l.b16 %v325
    %v1020 = vunpack.c.h.b16 %v325
    %v1021 = vunpack.c.l.b16 %v326
    %v1022 = vunpack.c.h.b16 %v326
    %v1023 = vunpack.c.l.b16 %v327
    %v1024 = vunpack.c.h.b16 %v327
    %v1025 = vunpack.c.l.b16 %v328
    %v1026 = vunpack.c.h.b16 %v328
    %v1027 = vunpack.c.l.b16 %v329
    %v1028 = vunpack.c.h.b16 %v329
    %v1029 = vunpack.c.l.b16 %v330
    %v1030 = vunpack.c.h.b16 %v330
    %v1031 = vunpack.c.l.b16 %v331
    %v1032 = vunpack.c.h.b16 %v331
    %v1033 = vunpack.c.l.b16 %v332
    %v1034 = vunpack.c.h.b16 %v332
    %v1035 = vunpack.c.l.b16 %v333
    %v1036 = vunpack.c.h.b16 %v333
    %v1037 = vunpack.c.l.b16 %v334
    %v1038 = vunpack.c.h.b16 %v334
    %v1039 = vunpack.c.l.b16 %v335
    %v1040 = vunpack.c.h.b16 %v335
    %v1041 = vunpack.c.l.b16 %v336
    %v1042 = vunpack.c.h.b16 %v336
    %v1043 = vunpack.c.l.b16 %v337
    %v1044 = vunpack.c.h.b16 %v337
    %v1045 = vunpack.c.l.b16 %v338
    %v1046 = vunpack.c.h.b16 %v338
    %v1047 = vunpack.c.l.b16 %v339
    %v1048 = vunpack.c.h.b16 %v339
    %v1049 = vunpack.c.l.b16 %v340
    %v1050 = vunpack.c.h.b16 %v340
    %v1051 = vunpack.c.l.b16 %v341
    %v1052 = vunpack.c.h.b16 %v341
    %v1053 = vunpack.c.l.b16 %v342
    %v1054 = vunpack.c.h.b16 %v342
    %v1055 = vunpack.c.l.b16 %v343
    %v1056 = vunpack.c.h.b16 %v343
    %v1057 = vunpack.c.l.b16 %v344
    %v1058 = vunpack.c.h.b16 %v344
    %v1059 = vunpack.c.l.b16 %v345
    %v1060 = vunpack.c.h.b16 %v345
    %v1061 = vunpack.c.l.b16 %v346
    %v1062 = vunpack.c.h.b16 %v346
    %v1063 = vunpack.c.l.b16 %v347
    %v1064 = vunpack.c.h.b16 %v347
    %v1065 = vunpack.c.l.b16 %v348
    %v1066 = vunpack.c.h.b16 %v348
    %v1067 = vunpack.c.l.b16 %v349
    %v1068 = vunpack.c.h.b16 %v349
    %v1069 = vpack.c.b16 %v625, %v621
    %v1070 = vpack.c.b16 %v626, %v622
    %v1071 = vpack.c.b16 %v627, %v623
    %v1072 = vpack.c.b16 %v628, %v624
    %v1073 = vpack.c.b16 %v633, %v629
    %v1074 = vpack.c.b16 %v634, %v630
    %v1075 = vpack.c.b16 %v635, %v631
    %v1076 = vpack.c.b16 %v636, %v632
    %v1077 = vpack.c.b16 %v641, %v637
    %v1078 = vpack.c.b16 %v642, %v638
    %v1079 = vpack.c.b16 %v643, %v639
    %v1080 = vpack.c.b16 %v644, %v640
    %v1081 = vpack.c.b16 %v649, %v645
    %v1082 = vpack.c.b16 %v650, %v646
    %v1083 = vpack.c.b16 %v651, %v647
    %v1084 = vpack.c.b16 %v652, %v648
    %v1085 = vpack.c.b16 %v657, %v653
    %v1086 = vpack.c.b16 %v658, %v654
    %v1087 = vpack.c.b16 %v659, %v655
    %v1088 = vpack.c.b16 %v660, %v656
    %v1089 = vpack.c.b16 %v665, %v661
    %v1090 = vpack.c.b16 %v666, %v662
    %v1091 = vpack.c.b16 %v667, %v663
    %v1092 = vpack.c.b16 %v668, %v664
    %v1093 = vpack.c.b16 %v673, %v669
    %v1094 = vpack.c.b16 %v674, %v670
    %v1095 = vpack.c.b16 %v675, %v671
    %v1096 = vpack.c.b16 %v676, %v672
    %v1097 = vpack.c.b16 %v681, %v677
    %v1098 = vpack.c.b16 %v682, %v678
    %v1099 = vpack.c.b16 %v683, %v679
    %v1100 = vpack.c.b16 %v684, %v680
    %v1101 = vpack.c.b16 %v689, %v685
    %v1102 = vpack.c.b16 %v690, %v686
    %v1103 = vpack.c.b16 %v691, %v687
    %v1104 = vpack.c.b16 %v692, %v688
    %v1105 = vpack.c.b16 %v697, %v693
    %v1106 = vpack.c.b16 %v698, %v694
    %v1107 = vpack.c.b16 %v699, %v695
    %v1108 = vpack.c.b16 %v700, %v696
    %v1109 = vpack.c.b16 %v705, %v701
    %v1110 = vpack.c.b16 %v706, %v702
    %v1111 = vpack.c.b16 %v707, %v703
    %v1112 = vpack.c.b16 %v708, %v704
    %v1113 = vpack.c.b16 %v713, %v709
    %v1114 = vpack.c.b16 %v714, %v710
    %v1115 = vpack.c.b16 %v715, %v711
    %v1116 = vpack.c.b16 %v716, %v712
    %v1117 = vpack.c.b16 %v721, %v717
    %v1118 = vpack.c.b16 %v722, %v718
    %v1119 = vpack.c.b16 %v723, %v719
    %v1120 = vpack.c.b16 %v724, %v720
    %v1121 = vpack.c.b16 %v729, %v725
    %v1122 = vpack.c.b16 %v730, %v726
    %v1123 = vpack.c.b16 %v731, %v727
    %v1124 = vpack.c.b16 %v732, %v728
    %v1125 = vpack.c.b16 %v737, %v733
    %v1126 = vpack.c.b16 %v738, %v734
    %v1127 = vpack.c.b16 %v739, %v735
    %v1128 = vpack.c.b16 %v740, %v736
    %v1129 = vpack.c.b16 %v745, %v741
    %v1130 = vpack.c.b16 %v746, %v742
    %v1131 = vpack.c.b16 %v747, %v743
    %v1132 = vpack.c.b16 %v748, %v744
    %v1133 = vpack.c.b16 %v753, %v749
    %v1134 = vpack.c.b16 %v754, %v750
    %v1135 = vpack.c.b16 %v755, %v751
    %v1136 = vpack.c.b16 %v756, %v752
    %v1137 = vpack.c.b16 %v761, %v757
    %v1138 = vpack.c.b16 %v762, %v758
    %v1139 = vpack.c.b16 %v763, %v759
    %v1140 = vpack.c.b16 %v764, %v760
    %v1141 = vpack.c.b16 %v769, %v765
    %v1142 = vpack.c.b16 %v770, %v766
    %v1143 = vpack.c.b16 %v771, %v767
    %v1144 = vpack.c.b16 %v772, %v768
    %v1145 = vpack.c.b16 %v777, %v773
    %v1146 = vpack.c.b16 %v778, %v774
    %v1147 = vpack.c.b16 %v779, %v775
    %v1148 = vpack.c.b16 %v780, %v776
    %v1149 = vpack.c.b16 %v785, %v781
    %v1150 = vpack.c.b16 %v786, %v782
    %v1151 = vpack.c.b16 %v787, %v783
    %v1152 = vpack.c.b16 %v788, %v784
    %v1153 = vpack.c.b16 %v793, %v789
    %v1154 = vpack.c.b16 %v794, %v790
    %v1155 = vpack.c.b16 %v795, %v791
    %v1156 = vpack.c.b16 %v796, %v792
    %v1157 = vpack.c.b16 %v801, %v797
    %v1158 = vpack.c.b16 %v802, %v798
    %v1159 = vpack.c.b16 %v803, %v799
    %v1160 = vpack.c.b16 %v804, %v800
    %v1161 = vpack.c.b16 %v809, %v805
    %v1162 = vpack.c.b16 %v810, %v806
    %v1163 = vpack.c.b16 %v811, %v807
    %v1164 = vpack.c.b16 %v812, %v808
    %v1165 = vpack.c.b16 %v817, %v813
    %v1166 = vpack.c.b16 %v818, %v814
    %v1167 = vpack.c.b16 %v819, %v815
    %v1168 = vpack.c.b16 %v820, %v816
    %v1169 = vpack.c.b16 %v825, %v821
    %v1170 = vpack.c.b16 %v826, %v822
    %v1171 = vpack.c.b16 %v827, %v823
    %v1172 = vpack.c.b16 %v828, %v824
    %v1173 = vpack.c.b16 %v833, %v829
    %v1174 = vpack.c.b16 %v834, %v830
    %v1175 = vpack.c.b16 %v835, %v831
    %v1176 = vpack.c.b16 %v836, %v832
    %v1177 = vpack.c.b16 %v841, %v837
    %v1178 = vpack.c.b16 %v842, %v838
    %v1179 = vpack.c.b16 %v843, %v839
    %v1180 = vpack.c.b16 %v844, %v840
    %v1181 = vpack.c.b16 %v849, %v845
    %v1182 = vpack.c.b16 %v850, %v846
    %v1183 = vpack.c.b16 %v851, %v847
    %v1184 = vpack.c.b16 %v852, %v848
    %v1185 = vpack.c.b16 %v857, %v853
    %v1186 = vpack.c.b16 %v858, %v854
    %v1187 = vpack.c.b16 %v859, %v855
    %v1188 = vpack.c.b16 %v860, %v856
    %v1189 = vpack.c.b16 %v865, %v861
    %v1190 = vpack.c.b16 %v866, %v862
    %v1191 = vpack.c.b16 %v867, %v863
    %v1192 = vpack.c.b16 %v868, %v864
    %v1193 = vpack.c.b16 %v873, %v869
    %v1194 = vpack.c.b16 %v874, %v870
    %v1195 = vpack.c.b16 %v875, %v871
    %v1196 = vpack.c.b16 %v876, %v872
    %v1197 = vpack.c.b16 %v881, %v877
    %v1198 = vpack.c.b16 %v882, %v878
    %v1199 = vpack.c.b16 %v883, %v879
    %v1200 = vpack.c.b16 %v884, %v880
    %v1201 = vpack.c.b16 %v889, %v885
    %v1202 = vpack.c.b16 %v890, %v886
    %v1203 = vpack.c.b16 %v891, %v887
    %v1204 = vpack.c.b16 %v892, %v888
    %v1205 = vpack.c.b16 %v897, %v893
    %v1206 = vpack.c.b16 %v898, %v894
    %v1207 = vpack.c.b16 %v899, %v895
    %v1208 = vpack.c.b16 %v900, %v896
    %v1209 = vpack.c.b16 %v905, %v901
    %v1210 = vpack.c.b16 %v906, %v902
    %v1211 = vpack.c.b16 %v907, %v903
    %v1212 = vpack.c.b16 %v908, %v904
    %v1213 = vpack.c.b16 %v913, %v909
    %v1214 = vpack.c.b16 %v914, %v910
    %v1215 = vpack.c.b16 %v915, %v911
    %v1216 = vpack.c.b16 %v916, %v912
    %v1217 = vpack.c.b16 %v921, %v917
    %v1218 = vpack.c.b16 %v922, %v918
    %v1219 = vpack.c.b16 %v923, %v919
    %v1220 = vpack.c.b16 %v924, %v920
    %v1221 = vpack.c.b16 %v929, %v925
    %v1222 = vpack.c.b16 %v930, %v926
    %v1223 = vpack.c.b16 %v931, %v927
    %v1224 = vpack.c.b16 %v932, %v928
    %v1225 = vpack.c.b16 %v937, %v933
    %v1226 = vpack.c.b16 %v938, %v934
    %v1227 = vpack.c.b16 %v939, %v935
    %v1228 = vpack.c.b16 %v940, %v936
    %v1229 = vpack.c.b16 %v945, %v941
    %v1230 = vpack.c.b16 %v946, %v942
    %v1231 = vpack.c.b16 %v947, %v943
    %v1232 = vpack.c.b16 %v948, %v944
    %v1233 = vpack.c.b16 %v953, %v949
    %v1234 = vpack.c.b16 %v954, %v950
    %v1235 = vpack.c.b16 %v955, %v951
    %v1236 = vpack.c.b16 %v956, %v952
    %v1237 = vpack.c.b16 %v961, %v957
    %v1238 = vpack.c.b16 %v962, %v958
    %v1239 = vpack.c.b16 %v963, %v959
    %v1240 = vpack.c.b16 %v964, %v960
    %v1241 = vpack.c.b16 %v969, %v965
    %v1242 = vpack.c.b16 %v970, %v966
    %v1243 = vpack.c.b16 %v971, %v967
    %v1244 = vpack.c.b16 %v972, %v968
    %v1245 = vpack.c.b16 %v977, %v973
    %v1246 = vpack.c.b16 %v978, %v974
    %v1247 = vpack.c.b16 %v979, %v975
    %v1248 = vpack.c.b16 %v980, %v976
    %v1249 = vpack.c.b16 %v985, %v981
    %v1250 = vpack.c.b16 %v986, %v982
    %v1251 = vpack.c.b16 %v987, %v983
    %v1252 = vpack.c.b16 %v988, %v984
    %v1253 = vpack.c.b16 %v993, %v989
    %v1254 = vpack.c.b16 %v994, %v990
    %v1255 = vpack.c.b16 %v995, %v991
    %v1256 = vpack.c.b16 %v996, %v992
    %v1257 = vpack.c.b16 %v1001, %v997
    %v1258 = vpack.c.b16 %v1002, %v998
    %v1259 = vpack.c.b16 %v1003, %v999
    %v1260 = vpack.c.b16 %v1004, %v1000
    %v1261 = vpack.c.b16 %v1009, %v1005
    %v1262 = vpack.c.b16 %v1010, %v1006
    %v1263 = vpack.c.b16 %v1011, %v1007
    %v1264 = vpack.c.b16 %v1012, %v1008
    %v1265 = vpack.c.b16 %v1017, %v1013
    %v1266 = vpack.c.b16 %v1018, %v1014
    %v1267 = vpack.c.b16 %v1019, %v1015
    %v1268 = vpack.c.b16 %v1020, %v1016
    %v1269 = vpack.c.b16 %v1025, %v1021
    %v1270 = vpack.c.b16 %v1026, %v1022
    %v1271 = vpack.c.b16 %v1027, %v1023
    %v1272 = vpack.c.b16 %v1028, %v1024
    %v1273 = vpack.c.b16 %v1033, %v1029
    %v1274 = vpack.c.b16 %v1034, %v1030
    %v1275 = vpack.c.b16 %v1035, %v1031
    %v1276 = vpack.c.b16 %v1036, %v1032
    %v1277 = vpack.c.b16 %v1041, %v1037
    %v1278 = vpack.c.b16 %v1042, %v1038
    %v1279 = vpack.c.b16 %v1043, %v1039
    %v1280 = vpack.c.b16 %v1044, %v1040
    %v1281 = vpack.c.b16 %v1049, %v1045
    %v1282 = vpack.c.b16 %v1050, %v1046
    %v1283 = vpack.c.b16 %v1051, %v1047
    %v1284 = vpack.c.b16 %v1052, %v1048
    %v1285 = vpack.c.b16 %v1057, %v1053
    %v1286 = vpack.c.b16 %v1058, %v1054
    %v1287 = vpack.c.b16 %v1059, %v1055
    %v1288 = vpack.c.b16 %v1060, %v1056
    %v1289 = vpack.c.b16 %v1065, %v1061
    %v1290 = vpack.c.b16 %v1066, %v1062
    %v1291 = vpack.c.b16 %v1067, %v1063
    %v1292 = vpack.c.b16 %v1068, %v1064
    %1517 = vmatprep.subr.bf16.mxu0 %v1070
    %1518 = vmatpush1.bf16.msra.mxu0 %v1069
    %1519 = vmatprep.subr.bf16.mxu0 %v1074
    %1520 = vmatpush1.bf16.msra.mxu0 %v1073
    %1521 = vmatprep.subr.bf16.mxu0 %v1078
    %1522 = vmatpush1.bf16.msra.mxu0 %v1077
    %1523 = vmatprep.subr.bf16.mxu0 %v1082
    %1524 = vmatpush1.bf16.msra.mxu0 %v1081
    %1525 = vmatprep.subr.bf16.mxu0 %v1086
    %1526 = vmatpush1.bf16.msra.mxu0 %v1085
    %1527 = vmatprep.subr.bf16.mxu0 %v1090
    %1528 = vmatpush1.bf16.msra.mxu0 %v1089
    %1529 = vmatprep.subr.bf16.mxu0 %v1094
    %1530 = vmatpush1.bf16.msra.mxu0 %v1093
    %1531 = vmatprep.subr.bf16.mxu0 %v1098
    %1532 = vmatpush1.bf16.msra.mxu0 %v1097
    %1533 = vmatprep.subr.bf16.mxu0 %v1102
    %1534 = vmatpush1.bf16.msra.mxu0 %v1101
    %1535 = vmatprep.subr.bf16.mxu0 %v1106
    %1536 = vmatpush1.bf16.msra.mxu0 %v1105
    %1537 = vmatprep.subr.bf16.mxu0 %v1110
    %1538 = vmatpush1.bf16.msra.mxu0 %v1109
    %1539 = vmatprep.subr.bf16.mxu0 %v1114
    %1540 = vmatpush1.bf16.msra.mxu0 %v1113
    %1541 = vmatprep.subr.bf16.mxu0 %v1118
    %1542 = vmatpush1.bf16.msra.mxu0 %v1117
    %1543 = vmatprep.subr.bf16.mxu0 %v1122
    %1544 = vmatpush1.bf16.msra.mxu0 %v1121
    %1545 = vmatprep.subr.bf16.mxu0 %v1126
    %1546 = vmatpush1.bf16.msra.mxu0 %v1125
    %1547 = vmatprep.subr.bf16.mxu0 %v1130
    %1548 = vmatpush1.bf16.msra.mxu0 %v1129
    %1549 = vmatprep.mubr.bf16.mxu0 %v384
    %1550 = vmatmul.mubr.bf16.gmra.mrb[0].mxu0 %v383
    %v1551 = vpop.f32.mrb[0].mxu0
    %v1552 = vadd.f32 %v355, %v1551
    %v1553 = vpop.f32.mrb[0].mxu0
    %v1554 = vadd.f32 %v359, %v1553
    %v1555 = vpop.f32.mrb[0].mxu0
    %v1556 = vpop.f32.mrb[0].mxu0
    %1557 = vdwg.mxu0
    %1558 = vmatprep.subr.bf16.mxu0 %v1134
    %1559 = vmatpush1.bf16.msra.mxu0 %v1133
    %1560 = vmatprep.subr.bf16.mxu0 %v1138
    %1561 = vmatpush1.bf16.msra.mxu0 %v1137
    %1562 = vmatprep.subr.bf16.mxu0 %v1142
    %1563 = vmatpush1.bf16.msra.mxu0 %v1141
    %1564 = vmatprep.subr.bf16.mxu0 %v1146
    %1565 = vmatpush1.bf16.msra.mxu0 %v1145
    %1566 = vmatprep.subr.bf16.mxu0 %v1150
    %1567 = vmatpush1.bf16.msra.mxu0 %v1149
    %1568 = vmatprep.subr.bf16.mxu0 %v1154
    %1569 = vmatpush1.bf16.msra.mxu0 %v1153
    %1570 = vmatprep.subr.bf16.mxu0 %v1158
    %1571 = vmatpush1.bf16.msra.mxu0 %v1157
    %1572 = vmatprep.subr.bf16.mxu0 %v1162
    %1573 = vmatpush1.bf16.msra.mxu0 %v1161
    %1574 = vmatprep.subr.bf16.mxu0 %v1166
    %1575 = vmatpush1.bf16.msra.mxu0 %v1165
    %1576 = vmatprep.subr.bf16.mxu0 %v1170
    %1577 = vmatpush1.bf16.msra.mxu0 %v1169
    %1578 = vmatprep.subr.bf16.mxu0 %v1174
    %1579 = vmatpush1.bf16.msra.mxu0 %v1173
    %1580 = vmatprep.subr.bf16.mxu0 %v1178
    %1581 = vmatpush1.bf16.msra.mxu0 %v1177
    %1582 = vmatprep.subr.bf16.mxu0 %v1182
    %1583 = vmatpush1.bf16.msra.mxu0 %v1181
    %1584 = vmatprep.subr.bf16.mxu0 %v1186
    %1585 = vmatpush1.bf16.msra.mxu0 %v1185
    %1586 = vmatprep.subr.bf16.mxu0 %v1190
    %1587 = vmatpush1.bf16.msra.mxu0 %v1189
    %1588 = vmatprep.subr.bf16.mxu0 %v1194
    %1589 = vmatpush1.bf16.msra.mxu0 %v1193
    %1590 = vmatprep.mubr.bf16.mxu0 %v386
    %1591 = vmatmul.mubr.bf16.gmra.mrb[0].mxu0 %v385
    %v1592 = vpop.f32.mrb[0].mxu0
    %v1593 = vadd.f32 %v1552, %v1592
    %v1594 = vpop.f32.mrb[0].mxu0
    %v1595 = vadd.f32 %v1554, %v1594
    %v1596 = vpop.f32.mrb[0].mxu0
    %v1597 = vpop.f32.mrb[0].mxu0
    %1598 = vdwg.mxu0
    %1599 = vmatprep.subr.bf16.mxu0 %v1198
    %1600 = vmatpush1.bf16.msra.mxu0 %v1197
    %1601 = vmatprep.subr.bf16.mxu0 %v1202
    %1602 = vmatpush1.bf16.msra.mxu0 %v1201
    %1603 = vmatprep.subr.bf16.mxu0 %v1206
    %1604 = vmatpush1.bf16.msra.mxu0 %v1205
    %1605 = vmatprep.subr.bf16.mxu0 %v1210
    %1606 = vmatpush1.bf16.msra.mxu0 %v1209
    %1607 = vmatprep.subr.bf16.mxu0 %v1214
    %1608 = vmatpush1.bf16.msra.mxu0 %v1213
    %1609 = vmatprep.subr.bf16.mxu0 %v1218
    %1610 = vmatpush1.bf16.msra.mxu0 %v1217
    %1611 = vmatprep.subr.bf16.mxu0 %v1222
    %1612 = vmatpush1.bf16.msra.mxu0 %v1221
    %1613 = vmatprep.subr.bf16.mxu0 %v1226
    %1614 = vmatpush1.bf16.msra.mxu0 %v1225
    %1615 = vmatprep.subr.bf16.mxu0 %v1230
    %1616 = vmatpush1.bf16.msra.mxu0 %v1229
    %1617 = vmatprep.subr.bf16.mxu0 %v1234
    %1618 = vmatpush1.bf16.msra.mxu0 %v1233
    %1619 = vmatprep.subr.bf16.mxu0 %v1238
    %1620 = vmatpush1.bf16.msra.mxu0 %v1237
    %1621 = vmatprep.subr.bf16.mxu0 %v1242
    %1622 = vmatpush1.bf16.msra.mxu0 %v1241
    %1623 = vmatprep.subr.bf16.mxu0 %v1246
    %1624 = vmatpush1.bf16.msra.mxu0 %v1245
    %1625 = vmatprep.subr.bf16.mxu0 %v1250
    %1626 = vmatpush1.bf16.msra.mxu0 %v1249
    %1627 = vmatprep.subr.bf16.mxu0 %v1254
    %1628 = vmatpush1.bf16.msra.mxu0 %v1253
    %1629 = vmatprep.subr.bf16.mxu0 %v1258
    %1630 = vmatpush1.bf16.msra.mxu0 %v1257
    %1631 = vmatprep.mubr.bf16.mxu0 %v388
    %1632 = vmatmul.mubr.bf16.gmra.mrb[0].mxu0 %v387
    %v1633 = vpop.f32.mrb[0].mxu0
    %v1634 = vadd.f32 %v1593, %v1633
    %v1635 = vpop.f32.mrb[0].mxu0
    %v1636 = vadd.f32 %v1595, %v1635
    %v1637 = vpop.f32.mrb[0].mxu0
    %v1638 = vpop.f32.mrb[0].mxu0
    %1639 = vdwg.mxu0
    %1640 = vmatprep.subr.bf16.mxu0 %v1262
    %1641 = vmatpush1.bf16.msra.mxu0 %v1261
    %1642 = vmatprep.subr.bf16.mxu0 %v1266
    %1643 = vmatpush1.bf16.msra.mxu0 %v1265
    %1644 = vmatprep.subr.bf16.mxu0 %v1270
    %1645 = vmatpush1.bf16.msra.mxu0 %v1269
    %1646 = vmatprep.subr.bf16.mxu0 %v1274
    %1647 = vmatpush1.bf16.msra.mxu0 %v1273
    %1648 = vmatprep.subr.bf16.mxu0 %v1278
    %1649 = vmatpush1.bf16.msra.mxu0 %v1277
    %1650 = vmatprep.subr.bf16.mxu0 %v1282
    %1651 = vmatpush1.bf16.msra.mxu0 %v1281
    %1652 = vmatprep.subr.bf16.mxu0 %v1286
    %1653 = vmatpush1.bf16.msra.mxu0 %v1285
    %1654 = vmatprep.subr.bf16.mxu0 %v1290
    %1655 = vmatpush1.bf16.msra.mxu0 %v1289
    %1656 = vmatprep.subr.bf16.mxu0 0
    %1657 = vmatpush1.bf16.msra.mxu0 0
    %1658 = vmatprep.subr.bf16.mxu0 0
    %1659 = vmatpush1.bf16.msra.mxu0 0
    %1660 = vmatprep.subr.bf16.mxu0 0
    %1661 = vmatpush1.bf16.msra.mxu0 0
    %1662 = vmatprep.subr.bf16.mxu0 0
    %1663 = vmatpush1.bf16.msra.mxu0 0
    %1664 = vmatprep.subr.bf16.mxu0 0
    %1665 = vmatpush1.bf16.msra.mxu0 0
    %1666 = vmatprep.subr.bf16.mxu0 0
    %1667 = vmatpush1.bf16.msra.mxu0 0
    %1668 = vmatprep.subr.bf16.mxu0 0
    %1669 = vmatpush1.bf16.msra.mxu0 0
    %1670 = vmatprep.subr.bf16.mxu0 0
    %1671 = vmatpush1.bf16.msra.mxu0 0
    %1672 = vmatprep.mubr.bf16.mxu0 0
    %1673 = vmatmul.mubr.bf16.gmra.mrb[0].mxu0 %v389
    %v1674 = vpop.f32.mrb[0].mxu0
    %v1675 = vadd.f32 %v1634, %v1674
    %v1676 = vpop.f32.mrb[0].mxu0
    %v1677 = vadd.f32 %v1636, %v1676
    %v1678 = vpop.f32.mrb[0].mxu0
    %v1679 = vpop.f32.mrb[0].mxu0
    %1680 = vdwg.mxu0
    %1681 = vmatprep.subr.bf16.mxu0 %v1072
    %1682 = vmatpush1.bf16.msra.mxu0 %v1071
    %1683 = vmatprep.subr.bf16.mxu0 %v1076
    %1684 = vmatpush1.bf16.msra.mxu0 %v1075
    %1685 = vmatprep.subr.bf16.mxu0 %v1080
    %1686 = vmatpush1.bf16.msra.mxu0 %v1079
    %1687 = vmatprep.subr.bf16.mxu0 %v1084
    %1688 = vmatpush1.bf16.msra.mxu0 %v1083
    %1689 = vmatprep.subr.bf16.mxu0 %v1088
    %1690 = vmatpush1.bf16.msra.mxu0 %v1087
    %1691 = vmatprep.subr.bf16.mxu0 %v1092
    %1692 = vmatpush1.bf16.msra.mxu0 %v1091
    %1693 = vmatprep.subr.bf16.mxu0 %v1096
    %1694 = vmatpush1.bf16.msra.mxu0 %v1095
    %1695 = vmatprep.subr.bf16.mxu0 %v1100
    %1696 = vmatpush1.bf16.msra.mxu0 %v1099
    %1697 = vmatprep.subr.bf16.mxu0 %v1104
    %1698 = vmatpush1.bf16.msra.mxu0 %v1103
    %1699 = vmatprep.subr.bf16.mxu0 %v1108
    %1700 = vmatpush1.bf16.msra.mxu0 %v1107
    %1701 = vmatprep.subr.bf16.mxu0 %v1112
    %1702 = vmatpush1.bf16.msra.mxu0 %v1111
    %1703 = vmatprep.subr.bf16.mxu0 %v1116
    %1704 = vmatpush1.bf16.msra.mxu0 %v1115
    %1705 = vmatprep.subr.bf16.mxu0 %v1120
    %1706 = vmatpush1.bf16.msra.mxu0 %v1119
    %1707 = vmatprep.subr.bf16.mxu0 %v1124
    %1708 = vmatpush1.bf16.msra.mxu0 %v1123
    %1709 = vmatprep.subr.bf16.mxu0 %v1128
    %1710 = vmatpush1.bf16.msra.mxu0 %v1127
    %1711 = vmatprep.subr.bf16.mxu0 %v1132
    %1712 = vmatpush1.bf16.msra.mxu0 %v1131
    %1713 = vmatprep.mubr.bf16.mxu0 %v384
    %1714 = vmatmul.mubr.bf16.gmra.mrb[0].mxu0 %v383
    %v1715 = vpop.f32.mrb[0].mxu0
    %v1716 = vadd.f32 %v363, %v1715
    %v1717 = vpop.f32.mrb[0].mxu0
    %v1718 = vadd.f32 %v367, %v1717
    %v1719 = vpop.f32.mrb[0].mxu0
    %v1720 = vpop.f32.mrb[0].mxu0
    %1721 = vdwg.mxu0
    %1722 = vmatprep.subr.bf16.mxu0 %v1136
    %1723 = vmatpush1.bf16.msra.mxu0 %v1135
    %1724 = vmatprep.subr.bf16.mxu0 %v1140
    %1725 = vmatpush1.bf16.msra.mxu0 %v1139
    %1726 = vmatprep.subr.bf16.mxu0 %v1144
    %1727 = vmatpush1.bf16.msra.mxu0 %v1143
    %1728 = vmatprep.subr.bf16.mxu0 %v1148
    %1729 = vmatpush1.bf16.msra.mxu0 %v1147
    %1730 = vmatprep.subr.bf16.mxu0 %v1152
    %1731 = vmatpush1.bf16.msra.mxu0 %v1151
    %1732 = vmatprep.subr.bf16.mxu0 %v1156
    %1733 = vmatpush1.bf16.msra.mxu0 %v1155
    %1734 = vmatprep.subr.bf16.mxu0 %v1160
    %1735 = vmatpush1.bf16.msra.mxu0 %v1159
    %1736 = vmatprep.subr.bf16.mxu0 %v1164
    %1737 = vmatpush1.bf16.msra.mxu0 %v1163
    %1738 = vmatprep.subr.bf16.mxu0 %v1168
    %1739 = vmatpush1.bf16.msra.mxu0 %v1167
    %1740 = vmatprep.subr.bf16.mxu0 %v1172
    %1741 = vmatpush1.bf16.msra.mxu0 %v1171
    %1742 = vmatprep.subr.bf16.mxu0 %v1176
    %1743 = vmatpush1.bf16.msra.mxu0 %v1175
    %1744 = vmatprep.subr.bf16.mxu0 %v1180
    %1745 = vmatpush1.bf16.msra.mxu0 %v1179
    %1746 = vmatprep.subr.bf16.mxu0 %v1184
    %1747 = vmatpush1.bf16.msra.mxu0 %v1183
    %1748 = vmatprep.subr.bf16.mxu0 %v1188
    %1749 = vmatpush1.bf16.msra.mxu0 %v1187
    %1750 = vmatprep.subr.bf16.mxu0 %v1192
    %1751 = vmatpush1.bf16.msra.mxu0 %v1191
    %1752 = vmatprep.subr.bf16.mxu0 %v1196
    %1753 = vmatpush1.bf16.msra.mxu0 %v1195
    %1754 = vmatprep.mubr.bf16.mxu0 %v386
    %1755 = vmatmul.mubr.bf16.gmra.mrb[0].mxu0 %v385
    %v1756 = vpop.f32.mrb[0].mxu0
    %v1757 = vadd.f32 %v1716, %v1756
    %v1758 = vpop.f32.mrb[0].mxu0
    %v1759 = vadd.f32 %v1718, %v1758
    %v1760 = vpop.f32.mrb[0].mxu0
    %v1761 = vpop.f32.mrb[0].mxu0
    %1762 = vdwg.mxu0
    %1763 = vmatprep.subr.bf16.mxu0 %v1200
    %1764 = vmatpush1.bf16.msra.mxu0 %v1199
    %1765 = vmatprep.subr.bf16.mxu0 %v1204
    %1766 = vmatpush1.bf16.msra.mxu0 %v1203
    %1767 = vmatprep.subr.bf16.mxu0 %v1208
    %1768 = vmatpush1.bf16.msra.mxu0 %v1207
    %1769 = vmatprep.subr.bf16.mxu0 %v1212
    %1770 = vmatpush1.bf16.msra.mxu0 %v1211
    %1771 = vmatprep.subr.bf16.mxu0 %v1216
    %1772 = vmatpush1.bf16.msra.mxu0 %v1215
    %1773 = vmatprep.subr.bf16.mxu0 %v1220
    %1774 = vmatpush1.bf16.msra.mxu0 %v1219
    %1775 = vmatprep.subr.bf16.mxu0 %v1224
    %1776 = vmatpush1.bf16.msra.mxu0 %v1223
    %1777 = vmatprep.subr.bf16.mxu0 %v1228
    %1778 = vmatpush1.bf16.msra.mxu0 %v1227
    %1779 = vmatprep.subr.bf16.mxu0 %v1232
    %1780 = vmatpush1.bf16.msra.mxu0 %v1231
    %1781 = vmatprep.subr.bf16.mxu0 %v1236
    %1782 = vmatpush1.bf16.msra.mxu0 %v1235
    %1783 = vmatprep.subr.bf16.mxu0 %v1240
    %1784 = vmatpush1.bf16.msra.mxu0 %v1239
    %1785 = vmatprep.subr.bf16.mxu0 %v1244
    %1786 = vmatpush1.bf16.msra.mxu0 %v1243
    %1787 = vmatprep.subr.bf16.mxu0 %v1248
    %1788 = vmatpush1.bf16.msra.mxu0 %v1247
    %1789 = vmatprep.subr.bf16.mxu0 %v1252
    %1790 = vmatpush1.bf16.msra.mxu0 %v1251
    %1791 = vmatprep.subr.bf16.mxu0 %v1256
    %1792 = vmatpush1.bf16.msra.mxu0 %v1255
    %1793 = vmatprep.subr.bf16.mxu0 %v1260
    %1794 = vmatpush1.bf16.msra.mxu0 %v1259
    %1795 = vmatprep.mubr.bf16.mxu0 %v388
    %1796 = vmatmul.mubr.bf16.gmra.mrb[0].mxu0 %v387
    %v1797 = vpop.f32.mrb[0].mxu0
    %v1798 = vadd.f32 %v1757, %v1797
    %v1799 = vpop.f32.mrb[0].mxu0
    %v1800 = vadd.f32 %v1759, %v1799
    %v1801 = vpop.f32.mrb[0].mxu0
    %v1802 = vpop.f32.mrb[0].mxu0
    %1803 = vdwg.mxu0
    %1804 = vmatprep.subr.bf16.mxu0 %v1264
    %1805 = vmatpush1.bf16.msra.mxu0 %v1263
    %1806 = vmatprep.subr.bf16.mxu0 %v1268
    %1807 = vmatpush1.bf16.msra.mxu0 %v1267
    %1808 = vmatprep.subr.bf16.mxu0 %v1272
    %1809 = vmatpush1.bf16.msra.mxu0 %v1271
    %1810 = vmatprep.subr.bf16.mxu0 %v1276
    %1811 = vmatpush1.bf16.msra.mxu0 %v1275
    %1812 = vmatprep.subr.bf16.mxu0 %v1280
    %1813 = vmatpush1.bf16.msra.mxu0 %v1279
    %1814 = vmatprep.subr.bf16.mxu0 %v1284
    %1815 = vmatpush1.bf16.msra.mxu0 %v1283
    %1816 = vmatprep.subr.bf16.mxu0 %v1288
    %1817 = vmatpush1.bf16.msra.mxu0 %v1287
    %1818 = vmatprep.subr.bf16.mxu0 %v1292
    %1819 = vmatpush1.bf16.msra.mxu0 %v1291
    %1820 = vmatprep.subr.bf16.mxu0 0
    %1821 = vmatpush1.bf16.msra.mxu0 0
    %1822 = vmatprep.subr.bf16.mxu0 0
    %1823 = vmatpush1.bf16.msra.mxu0 0
    %1824 = vmatprep.subr.bf16.mxu0 0
    %1825 = vmatpush1.bf16.msra.mxu0 0
    %1826 = vmatprep.subr.bf16.mxu0 0
    %1827 = vmatpush1.bf16.msra.mxu0 0
    %1828 = vmatprep.subr.bf16.mxu0 0
    %1829 = vmatpush1.bf16.msra.mxu0 0
    %1830 = vmatprep.subr.bf16.mxu0 0
    %1831 = vmatpush1.bf16.msra.mxu0 0
    %1832 = vmatprep.subr.bf16.mxu0 0
    %1833 = vmatpush1.bf16.msra.mxu0 0
    %1834 = vmatprep.subr.bf16.mxu0 0
    %1835 = vmatpush1.bf16.msra.mxu0 0
    %1836 = vmatprep.mubr.bf16.mxu0 0
    %1837 = vmatmul.mubr.bf16.gmra.mrb[0].mxu0 %v389
    %v1838 = vpop.f32.mrb[0].mxu0
    %v1839 = vadd.f32 %v1798, %v1838
    %v1840 = vpop.f32.mrb[0].mxu0
    %v1841 = vadd.f32 %v1800, %v1840
    %v1842 = vpop.f32.mrb[0].mxu0
    %v1843 = vpop.f32.mrb[0].mxu0
    %1844 = vdwg.mxu0
    %vm1845 = vcmp.gt.f32.partialorder %v1675, 0.0
    %vm1846 = vcmp.gt.f32.partialorder %v1677, 0.0
    %vm1847 = vcmp.gt.f32.partialorder %v1839, 0.0
    %vm1848 = vcmp.gt.f32.partialorder %v1841, 0.0
    %v1849 = vmul.f32 %v1675, 0.2
    %v1850 = vmul.f32 %v1677, 0.2
    %v1851 = vmul.f32 %v1839, 0.2
    %v1852 = vmul.f32 %v1841, 0.2
    %v1853 = vsel %vm1845, %v1675, %v1849
    %v1854 = vsel %vm1846, %v1677, %v1850
    %v1855 = vsel %vm1847, %v1839, %v1851
    %v1856 = vsel %vm1848, %v1841, %v1852
    %v1857 = vpack.c.bf16 %v1853, %v1853
    %v1858 = vpack.c.bf16 %v1854, %v1854
    %v1859 = vpack.c.bf16 %v1855, %v1855
    %v1860 = vpack.c.bf16 %v1856, %v1856
    %v1861 = vld [vmem:[#allocation7] sm:$0xff]
    %v1862 = vld [vmem:[#allocation7 + $0x8] sm:$0xff]
    %v1863 = vld [vmem:[#allocation7 + $0x10] sm:$0xff]
    %v1864 = vld [vmem:[#allocation7 + $0x18] sm:$0xff]
    %v1865 = vld [vmem:[#allocation7 + $0x20] sm:$0xff]
    %v1866 = vld [vmem:[#allocation7 + $0x28] sm:$0xff]
    %v1867 = vld [vmem:[#allocation7 + $0x30] sm:$0xff]
    %v1868 = vld [vmem:[#allocation7 + $0x38] sm:$0xff]
    %v1869 = vld [vmem:[#allocation7 + $0x40] sm:$0xff]
    %v1870 = vld [vmem:[#allocation7 + $0x48] sm:$0xff]
    %v1871 = vld [vmem:[#allocation7 + $0x50] sm:$0xff]
    %v1872 = vld [vmem:[#allocation7 + $0x58] sm:$0xff]
    %v1873 = vld [vmem:[#allocation7 + $0x60] sm:$0xff]
    %v1874 = vld [vmem:[#allocation7 + $0x68] sm:$0xff]
    %v1875 = vld [vmem:[#allocation7 + $0x70] sm:$0xff]
    %v1876 = vld [vmem:[#allocation7 + $0x78] sm:$0xff]
    %v1877 = vld [vmem:[#allocation7 + $0x80] sm:$0xff]
    %v1878 = vld [vmem:[#allocation7 + $0x88] sm:$0xff]
    %v1879 = vld [vmem:[#allocation7 + $0x90] sm:$0xff]
    %v1880 = vld [vmem:[#allocation7 + $0x98] sm:$0xff]
    %v1881 = vld [vmem:[#allocation7 + $0xa0] sm:$0xff]
    %v1882 = vld [vmem:[#allocation7 + $0xa8] sm:$0xff]
    %v1883 = vld [vmem:[#allocation7 + $0xb0] sm:$0xff]
    %v1884 = vld [vmem:[#allocation7 + $0xb8] sm:$0xff]
    %v1885 = vld [vmem:[#allocation7 + $0xc0] sm:$0xff]
    %v1886 = vld [vmem:[#allocation7 + $0xc8] sm:$0xff]
    %v1887 = vld [vmem:[#allocation7 + $0xd0] sm:$0xff]
    %v1888 = vld [vmem:[#allocation7 + $0xd8] sm:$0xff]
    %v1889 = vld [vmem:[#allocation7 + $0xe0] sm:$0xff]
    %v1890 = vld [vmem:[#allocation7 + $0xe8] sm:$0xff]
    %v1891 = vld [vmem:[#allocation7 + $0xf0] sm:$0xff]
    %v1892 = vld [vmem:[#allocation7 + $0xf8] sm:$0xff]
    %v1893 = vld [vmem:[#allocation7 + $0x100] sm:$0xff]
    %v1894 = vld [vmem:[#allocation7 + $0x108] sm:$0xff]
    %v1895 = vld [vmem:[#allocation7 + $0x110] sm:$0xff]
    %v1896 = vld [vmem:[#allocation7 + $0x118] sm:$0xff]
    %v1897 = vld [vmem:[#allocation7 + $0x120] sm:$0xff]
    %v1898 = vld [vmem:[#allocation7 + $0x128] sm:$0xff]
    %v1899 = vld [vmem:[#allocation7 + $0x130] sm:$0xff]
    %v1900 = vld [vmem:[#allocation7 + $0x138] sm:$0xff]
    %v1901 = vld [vmem:[#allocation7 + $0x140] sm:$0xff]
    %v1902 = vld [vmem:[#allocation7 + $0x148] sm:$0xff]
    %v1903 = vld [vmem:[#allocation7 + $0x150] sm:$0xff]
    %v1904 = vld [vmem:[#allocation7 + $0x158] sm:$0xff]
    %v1905 = vld [vmem:[#allocation7 + $0x160] sm:$0xff]
    %v1906 = vld [vmem:[#allocation7 + $0x168] sm:$0xff]
    %v1907 = vld [vmem:[#allocation7 + $0x170] sm:$0xff]
    %v1908 = vld [vmem:[#allocation7 + $0x178] sm:$0xff]
    %v1909 = vld [vmem:[#allocation7 + $0x180] sm:$0xff]
    %v1910 = vld [vmem:[#allocation7 + $0x188] sm:$0xff]
    %v1911 = vld [vmem:[#allocation7 + $0x190] sm:$0xff]
    %v1912 = vld [vmem:[#allocation7 + $0x198] sm:$0xff]
    %v1913 = vld [vmem:[#allocation7 + $0x1a0] sm:$0xff]
    %v1914 = vld [vmem:[#allocation7 + $0x1a8] sm:$0xff]
    %v1915 = vld [vmem:[#allocation7 + $0x1b0] sm:$0xff]
    %v1916 = vld [vmem:[#allocation7 + $0x1b8] sm:$0xff]
    %v1917 = vld [vmem:[#allocation7 + $0x1c0] sm:$0xff]
    %v1918 = vld [vmem:[#allocation7 + $0x1c8] sm:$0xff]
    %v1919 = vld [vmem:[#allocation7 + $0x1d0] sm:$0xff]
    %v1920 = vld [vmem:[#allocation7 + $0x1d8] sm:$0xff]
    %v1921 = vld [vmem:[#allocation7 + $0x1e0] sm:$0xff]
    %v1922 = vld [vmem:[#allocation7 + $0x1e8] sm:$0xff]
    %v1923 = vld [vmem:[#allocation7 + $0x1f0] sm:$0xff]
    %v1924 = vld [vmem:[#allocation7 + $0x1f8] sm:$0xff]
    %v1925 = vld [vmem:[%s4] sm:$0x3]
    %v1927 = vlaneseq
    %v1928 = vshrl.u32 %v1927, 7
    %v1929 = vsub.s32 0, %v1928
    %v1930 = vrot.slane %v1925, %v1929
    %v1931 = vlaneseq
    %v1932 = vshrl.u32 %v1931, 7
    %v1933 = vsub.s32 1, %v1932
    %v1934 = vrot.slane %v1925, %v1933
    %v2001 = vunpack.c.l.b16 %v1861
    %v2002 = vunpack.c.h.b16 %v1861
    %v2003 = vunpack.c.l.b16 %v1862
    %v2004 = vunpack.c.h.b16 %v1862
    %v2005 = vunpack.c.l.b16 %v1863
    %v2006 = vunpack.c.h.b16 %v1863
    %v2007 = vunpack.c.l.b16 %v1864
    %v2008 = vunpack.c.h.b16 %v1864
    %v2009 = vunpack.c.l.b16 %v1865
    %v2010 = vunpack.c.h.b16 %v1865
    %v2011 = vunpack.c.l.b16 %v1866
    %v2012 = vunpack.c.h.b16 %v1866
    %v2013 = vunpack.c.l.b16 %v1867
    %v2014 = vunpack.c.h.b16 %v1867
    %v2015 = vunpack.c.l.b16 %v1868
    %v2016 = vunpack.c.h.b16 %v1868
    %v2017 = vunpack.c.l.b16 %v1869
    %v2018 = vunpack.c.h.b16 %v1869
    %v2019 = vunpack.c.l.b16 %v1870
    %v2020 = vunpack.c.h.b16 %v1870
    %v2021 = vunpack.c.l.b16 %v1871
    %v2022 = vunpack.c.h.b16 %v1871
    %v2023 = vunpack.c.l.b16 %v1872
    %v2024 = vunpack.c.h.b16 %v1872
    %v2025 = vunpack.c.l.b16 %v1873
    %v2026 = vunpack.c.h.b16 %v1873
    %v2027 = vunpack.c.l.b16 %v1874
    %v2028 = vunpack.c.h.b16 %v1874
    %v2029 = vunpack.c.l.b16 %v1875
    %v2030 = vunpack.c.h.b16 %v1875
    %v2031 = vunpack.c.l.b16 %v1876
    %v2032 = vunpack.c.h.b16 %v1876
    %v2033 = vunpack.c.l.b16 %v1877
    %v2034 = vunpack.c.h.b16 %v1877
    %v2035 = vunpack.c.l.b16 %v1878
    %v2036 = vunpack.c.h.b16 %v1878
    %v2037 = vunpack.c.l.b16 %v1879
    %v2038 = vunpack.c.h.b16 %v1879
    %v2039 = vunpack.c.l.b16 %v1880
    %v2040 = vunpack.c.h.b16 %v1880
    %v2041 = vunpack.c.l.b16 %v1881
    %v2042 = vunpack.c.h.b16 %v1881
    %v2043 = vunpack.c.l.b16 %v1882
    %v2044 = vunpack.c.h.b16 %v1882
    %v2045 = vunpack.c.l.b16 %v1883
    %v2046 = vunpack.c.h.b16 %v1883
    %v2047 = vunpack.c.l.b16 %v1884
    %v2048 = vunpack.c.h.b16 %v1884
    %v2049 = vunpack.c.l.b16 %v1885
    %v2050 = vunpack.c.h.b16 %v1885
    %v2051 = vunpack.c.l.b16 %v1886
    %v2052 = vunpack.c.h.b16 %v1886
    %v2053 = vunpack.c.l.b16 %v1887
    %v2054 = vunpack.c.h.b16 %v1887
    %v2055 = vunpack.c.l.b16 %v1888
    %v2056 = vunpack.c.h.b16 %v1888
    %v2057 = vunpack.c.l.b16 %v1889
    %v2058 = vunpack.c.h.b16 %v1889
    %v2059 = vunpack.c.l.b16 %v1890
    %v2060 = vunpack.c.h.b16 %v1890
    %v2061 = vunpack.c.l.b16 %v1891
    %v2062 = vunpack.c.h.b16 %v1891
    %v2063 = vunpack.c.l.b16 %v1892
    %v2064 = vunpack.c.h.b16 %v1892
    %v2065 = vunpack.c.l.b16 %v1893
    %v2066 = vunpack.c.h.b16 %v1893
    %v2067 = vunpack.c.l.b16 %v1894
    %v2068 = vunpack.c.h.b16 %v1894
    %v2069 = vunpack.c.l.b16 %v1895
    %v2070 = vunpack.c.h.b16 %v1895
    %v2071 = vunpack.c.l.b16 %v1896
    %v2072 = vunpack.c.h.b16 %v1896
    %v2073 = vunpack.c.l.b16 %v1897
    %v2074 = vunpack.c.h.b16 %v1897
    %v2075 = vunpack.c.l.b16 %v1898
    %v2076 = vunpack.c.h.b16 %v1898
    %v2077 = vunpack.c.l.b16 %v1899
    %v2078 = vunpack.c.h.b16 %v1899
    %v2079 = vunpack.c.l.b16 %v1900
    %v2080 = vunpack.c.h.b16 %v1900
    %v2081 = vunpack.c.l.b16 %v1901
    %v2082 = vunpack.c.h.b16 %v1901
    %v2083 = vunpack.c.l.b16 %v1902
    %v2084 = vunpack.c.h.b16 %v1902
    %v2085 = vunpack.c.l.b16 %v1903
    %v2086 = vunpack.c.h.b16 %v1903
    %v2087 = vunpack.c.l.b16 %v1904
    %v2088 = vunpack.c.h.b16 %v1904
    %v2089 = vunpack.c.l.b16 %v1905
    %v2090 = vunpack.c.h.b16 %v1905
    %v2091 = vunpack.c.l.b16 %v1906
    %v2092 = vunpack.c.h.b16 %v1906
    %v2093 = vunpack.c.l.b16 %v1907
    %v2094 = vunpack.c.h.b16 %v1907
    %v2095 = vunpack.c.l.b16 %v1908
    %v2096 = vunpack.c.h.b16 %v1908
    %v2097 = vunpack.c.l.b16 %v1909
    %v2098 = vunpack.c.h.b16 %v1909
    %v2099 = vunpack.c.l.b16 %v1910
    %v2100 = vunpack.c.h.b16 %v1910
    %v2101 = vunpack.c.l.b16 %v1911
    %v2102 = vunpack.c.h.b16 %v1911
    %v2103 = vunpack.c.l.b16 %v1912
    %v2104 = vunpack.c.h.b16 %v1912
    %v2105 = vunpack.c.l.b16 %v1913
    %v2106 = vunpack.c.h.b16 %v1913
    %v2107 = vunpack.c.l.b16 %v1914
    %v2108 = vunpack.c.h.b16 %v1914
    %v2109 = vunpack.c.l.b16 %v1915
    %v2110 = vunpack.c.h.b16 %v1915
    %v2111 = vunpack.c.l.b16 %v1916
    %v2112 = vunpack.c.h.b16 %v1916
    %v2113 = vunpack.c.l.b16 %v1917
    %v2114 = vunpack.c.h.b16 %v1917
    %v2115 = vunpack.c.l.b16 %v1918
    %v2116 = vunpack.c.h.b16 %v1918
    %v2117 = vunpack.c.l.b16 %v1919
    %v2118 = vunpack.c.h.b16 %v1919
    %v2119 = vunpack.c.l.b16 %v1920
    %v2120 = vunpack.c.h.b16 %v1920
    %v2121 = vunpack.c.l.b16 %v1921
    %v2122 = vunpack.c.h.b16 %v1921
    %v2123 = vunpack.c.l.b16 %v1922
    %v2124 = vunpack.c.h.b16 %v1922
    %v2125 = vunpack.c.l.b16 %v1923
    %v2126 = vunpack.c.h.b16 %v1923
    %v2127 = vunpack.c.l.b16 %v1924
    %v2128 = vunpack.c.h.b16 %v1924
    %v2129 = vpack.c.b16 %v2003, %v2001
    %v2130 = vpack.c.b16 %v2004, %v2002
    %v2131 = vpack.c.b16 %v2007, %v2005
    %v2132 = vpack.c.b16 %v2008, %v2006
    %v2133 = vpack.c.b16 %v2011, %v2009
    %v2134 = vpack.c.b16 %v2012, %v2010
    %v2135 = vpack.c.b16 %v2015, %v2013
    %v2136 = vpack.c.b16 %v2016, %v2014
    %v2137 = vpack.c.b16 %v2019, %v2017
    %v2138 = vpack.c.b16 %v2020, %v2018
    %v2139 = vpack.c.b16 %v2023, %v2021
    %v2140 = vpack.c.b16 %v2024, %v2022
    %v2141 = vpack.c.b16 %v2027, %v2025
    %v2142 = vpack.c.b16 %v2028, %v2026
    %v2143 = vpack.c.b16 %v2031, %v2029
    %v2144 = vpack.c.b16 %v2032, %v2030
    %v2145 = vpack.c.b16 %v2035, %v2033
    %v2146 = vpack.c.b16 %v2036, %v2034
    %v2147 = vpack.c.b16 %v2039, %v2037
    %v2148 = vpack.c.b16 %v2040, %v2038
    %v2149 = vpack.c.b16 %v2043, %v2041
    %v2150 = vpack.c.b16 %v2044, %v2042
    %v2151 = vpack.c.b16 %v2047, %v2045
    %v2152 = vpack.c.b16 %v2048, %v2046
    %v2153 = vpack.c.b16 %v2051, %v2049
    %v2154 = vpack.c.b16 %v2052, %v2050
    %v2155 = vpack.c.b16 %v2055, %v2053
    %v2156 = vpack.c.b16 %v2056, %v2054
    %v2157 = vpack.c.b16 %v2059, %v2057
    %v2158 = vpack.c.b16 %v2060, %v2058
    %v2159 = vpack.c.b16 %v2063, %v2061
    %v2160 = vpack.c.b16 %v2064, %v2062
    %v2161 = vpack.c.b16 %v2067, %v2065
    %v2162 = vpack.c.b16 %v2068, %v2066
    %v2163 = vpack.c.b16 %v2071, %v2069
    %v2164 = vpack.c.b16 %v2072, %v2070
    %v2165 = vpack.c.b16 %v2075, %v2073
    %v2166 = vpack.c.b16 %v2076, %v2074
    %v2167 = vpack.c.b16 %v2079, %v2077
    %v2168 = vpack.c.b16 %v2080, %v2078
    %v2169 = vpack.c.b16 %v2083, %v2081
    %v2170 = vpack.c.b16 %v2084, %v2082
    %v2171 = vpack.c.b16 %v2087, %v2085
    %v2172 = vpack.c.b16 %v2088, %v2086
    %v2173 = vpack.c.b16 %v2091, %v2089
    %v2174 = vpack.c.b16 %v2092, %v2090
    %v2175 = vpack.c.b16 %v2095, %v2093
    %v2176 = vpack.c.b16 %v2096, %v2094
    %v2177 = vpack.c.b16 %v2099, %v2097
    %v2178 = vpack.c.b16 %v2100, %v2098
    %v2179 = vpack.c.b16 %v2103, %v2101
    %v2180 = vpack.c.b16 %v2104, %v2102
    %v2181 = vpack.c.b16 %v2107, %v2105
    %v2182 = vpack.c.b16 %v2108, %v2106
    %v2183 = vpack.c.b16 %v2111, %v2109
    %v2184 = vpack.c.b16 %v2112, %v2110
    %v2185 = vpack.c.b16 %v2115, %v2113
    %v2186 = vpack.c.b16 %v2116, %v2114
    %v2187 = vpack.c.b16 %v2119, %v2117
    %v2188 = vpack.c.b16 %v2120, %v2118
    %v2189 = vpack.c.b16 %v2123, %v2121
    %v2190 = vpack.c.b16 %v2124, %v2122
    %v2191 = vpack.c.b16 %v2127, %v2125
    %v2192 = vpack.c.b16 %v2128, %v2126
    %2257 = vmatprep.subr.bf16.mxu0 %v2130
    %2258 = vmatpush1.bf16.msra.mxu0 %v2129
    %2259 = vmatprep.subr.bf16.mxu0 %v2132
    %2260 = vmatpush1.bf16.msra.mxu0 %v2131
    %2261 = vmatprep.subr.bf16.mxu0 %v2134
    %2262 = vmatpush1.bf16.msra.mxu0 %v2133
    %2263 = vmatprep.subr.bf16.mxu0 %v2136
    %2264 = vmatpush1.bf16.msra.mxu0 %v2135
    %2265 = vmatprep.subr.bf16.mxu0 %v2138
    %2266 = vmatpush1.bf16.msra.mxu0 %v2137
    %2267 = vmatprep.subr.bf16.mxu0 %v2140
    %2268 = vmatpush1.bf16.msra.mxu0 %v2139
    %2269 = vmatprep.subr.bf16.mxu0 %v2142
    %2270 = vmatpush1.bf16.msra.mxu0 %v2141
    %2271 = vmatprep.subr.bf16.mxu0 %v2144
    %2272 = vmatpush1.bf16.msra.mxu0 %v2143
    %2273 = vmatprep.subr.bf16.mxu0 %v2146
    %2274 = vmatpush1.bf16.msra.mxu0 %v2145
    %2275 = vmatprep.subr.bf16.mxu0 %v2148
    %2276 = vmatpush1.bf16.msra.mxu0 %v2147
    %2277 = vmatprep.subr.bf16.mxu0 %v2150
    %2278 = vmatpush1.bf16.msra.mxu0 %v2149
    %2279 = vmatprep.subr.bf16.mxu0 %v2152
    %2280 = vmatpush1.bf16.msra.mxu0 %v2151
    %2281 = vmatprep.subr.bf16.mxu0 %v2154
    %2282 = vmatpush1.bf16.msra.mxu0 %v2153
    %2283 = vmatprep.subr.bf16.mxu0 %v2156
    %2284 = vmatpush1.bf16.msra.mxu0 %v2155
    %2285 = vmatprep.subr.bf16.mxu0 %v2158
    %2286 = vmatpush1.bf16.msra.mxu0 %v2157
    %2287 = vmatprep.subr.bf16.mxu0 %v2160
    %2288 = vmatpush1.bf16.msra.mxu0 %v2159
    %2289 = vmatprep.mubr.bf16.mxu0 %v1858
    %2290 = vmatmul.mubr.bf16.gmra.mrb[0].mxu0 %v1857
    %v2291 = vpop.f32.mrb[0].mxu0
    %v2292 = vadd.f32 %v1930, %v2291
    %v2293 = vpop.f32.mrb[0].mxu0
    %v2294 = vadd.f32 %v1934, %v2293
    %v2295 = vpop.f32.mrb[0].mxu0
    %v2296 = vpop.f32.mrb[0].mxu0
    %2297 = vdwg.mxu0
    %2298 = vmatprep.subr.bf16.mxu0 %v2162
    %2299 = vmatpush1.bf16.msra.mxu0 %v2161
    %2300 = vmatprep.subr.bf16.mxu0 %v2164
    %2301 = vmatpush1.bf16.msra.mxu0 %v2163
    %2302 = vmatprep.subr.bf16.mxu0 %v2166
    %2303 = vmatpush1.bf16.msra.mxu0 %v2165
    %2304 = vmatprep.subr.bf16.mxu0 %v2168
    %2305 = vmatpush1.bf16.msra.mxu0 %v2167
    %2306 = vmatprep.subr.bf16.mxu0 %v2170
    %2307 = vmatpush1.bf16.msra.mxu0 %v2169
    %2308 = vmatprep.subr.bf16.mxu0 %v2172
    %2309 = vmatpush1.bf16.msra.mxu0 %v2171
    %2310 = vmatprep.subr.bf16.mxu0 %v2174
    %2311 = vmatpush1.bf16.msra.mxu0 %v2173
    %2312 = vmatprep.subr.bf16.mxu0 %v2176
    %2313 = vmatpush1.bf16.msra.mxu0 %v2175
    %2314 = vmatprep.subr.bf16.mxu0 %v2178
    %2315 = vmatpush1.bf16.msra.mxu0 %v2177
    %2316 = vmatprep.subr.bf16.mxu0 %v2180
    %2317 = vmatpush1.bf16.msra.mxu0 %v2179
    %2318 = vmatprep.subr.bf16.mxu0 %v2182
    %2319 = vmatpush1.bf16.msra.mxu0 %v2181
    %2320 = vmatprep.subr.bf16.mxu0 %v2184
    %2321 = vmatpush1.bf16.msra.mxu0 %v2183
    %2322 = vmatprep.subr.bf16.mxu0 %v2186
    %2323 = vmatpush1.bf16.msra.mxu0 %v2185
    %2324 = vmatprep.subr.bf16.mxu0 %v2188
    %2325 = vmatpush1.bf16.msra.mxu0 %v2187
    %2326 = vmatprep.subr.bf16.mxu0 %v2190
    %2327 = vmatpush1.bf16.msra.mxu0 %v2189
    %2328 = vmatprep.subr.bf16.mxu0 %v2192
    %2329 = vmatpush1.bf16.msra.mxu0 %v2191
    %2330 = vmatprep.mubr.bf16.mxu0 %v1860
    %2331 = vmatmul.mubr.bf16.gmra.mrb[0].mxu0 %v1859
    %v2332 = vpop.f32.mrb[0].mxu0
    %v2333 = vadd.f32 %v2292, %v2332
    %v2334 = vpop.f32.mrb[0].mxu0
    %v2335 = vadd.f32 %v2294, %v2334
    %v2336 = vpop.f32.mrb[0].mxu0
    %v2337 = vpop.f32.mrb[0].mxu0
    %2338 = vdwg.mxu0
    %vm2339 = vcmp.gt.f32.partialorder %v2333, 0.0
    %vm2340 = vcmp.gt.f32.partialorder %v2335, 0.0
    %v2341 = vmul.f32 %v2333, 0.2
    %v2342 = vmul.f32 %v2335, 0.2
    %v2343 = vsel %vm2339, %v2333, %v2341
    %v2344 = vsel %vm2340, %v2335, %v2342
    %v2345 = vpack.c.bf16 %v2343, %v2343
    %v2346 = vpack.c.bf16 %v2344, %v2344
    %v2347 = vld [vmem:[#allocation8] sm:$0xf]
    %v2348 = vld [vmem:[#allocation8 + $0x4] sm:$0xf]
    %v2349 = vld [vmem:[#allocation8 + $0x8] sm:$0xf]
    %v2350 = vld [vmem:[#allocation8 + $0xc] sm:$0xf]
    %v2351 = vld [vmem:[#allocation8 + $0x10] sm:$0xf]
    %v2352 = vld [vmem:[#allocation8 + $0x14] sm:$0xf]
    %v2353 = vld [vmem:[#allocation8 + $0x18] sm:$0xf]
    %v2354 = vld [vmem:[#allocation8 + $0x1c] sm:$0xf]
    %v2355 = vld [vmem:[#allocation8 + $0x20] sm:$0xf]
    %v2356 = vld [vmem:[#allocation8 + $0x24] sm:$0xf]
    %v2357 = vld [vmem:[#allocation8 + $0x28] sm:$0xf]
    %v2358 = vld [vmem:[#allocation8 + $0x2c] sm:$0xf]
    %v2359 = vld [vmem:[#allocation8 + $0x30] sm:$0xf]
    %v2360 = vld [vmem:[#allocation8 + $0x34] sm:$0xf]
    %v2361 = vld [vmem:[#allocation8 + $0x38] sm:$0xf]
    %v2362 = vld [vmem:[#allocation8 + $0x3c] sm:$0xf]
    %v2363 = vld [vmem:[#allocation8 + $0x40] sm:$0xf]
    %v2364 = vld [vmem:[#allocation8 + $0x44] sm:$0xf]
    %v2365 = vld [vmem:[#allocation8 + $0x48] sm:$0xf]
    %v2366 = vld [vmem:[#allocation8 + $0x4c] sm:$0xf]
    %v2367 = vld [vmem:[#allocation8 + $0x50] sm:$0xf]
    %v2368 = vld [vmem:[#allocation8 + $0x54] sm:$0xf]
    %v2369 = vld [vmem:[#allocation8 + $0x58] sm:$0xf]
    %v2370 = vld [vmem:[#allocation8 + $0x5c] sm:$0xf]
    %v2371 = vld [vmem:[#allocation8 + $0x60] sm:$0xf]
    %v2372 = vld [vmem:[#allocation8 + $0x64] sm:$0xf]
    %v2373 = vld [vmem:[#allocation8 + $0x68] sm:$0xf]
    %v2374 = vld [vmem:[#allocation8 + $0x6c] sm:$0xf]
    %v2375 = vld [vmem:[#allocation8 + $0x70] sm:$0xf]
    %v2376 = vld [vmem:[#allocation8 + $0x74] sm:$0xf]
    %v2377 = vld [vmem:[#allocation8 + $0x78] sm:$0xf]
    %v2378 = vld [vmem:[#allocation8 + $0x7c] sm:$0xf]
    %v2379 = vld [vmem:[%s6] sm:$0x1]
    %v2381 = vlaneseq
    %v2382 = vshrl.u32 %v2381, 7
    %v2383 = vsub.s32 0, %v2382
    %v2384 = vrot.slane %v2379, %v2383
    %v2418 = vunpack.c.l.b16 %v2347
    %v2419 = vunpack.c.l.b16 %v2348
    %v2420 = vunpack.c.l.b16 %v2349
    %v2421 = vunpack.c.l.b16 %v2350
    %v2422 = vunpack.c.l.b16 %v2351
    %v2423 = vunpack.c.l.b16 %v2352
    %v2424 = vunpack.c.l.b16 %v2353
    %v2425 = vunpack.c.l.b16 %v2354
    %v2426 = vunpack.c.l.b16 %v2355
    %v2427 = vunpack.c.l.b16 %v2356
    %v2428 = vunpack.c.l.b16 %v2357
    %v2429 = vunpack.c.l.b16 %v2358
    %v2430 = vunpack.c.l.b16 %v2359
    %v2431 = vunpack.c.l.b16 %v2360
    %v2432 = vunpack.c.l.b16 %v2361
    %v2433 = vunpack.c.l.b16 %v2362
    %v2434 = vunpack.c.l.b16 %v2363
    %v2435 = vunpack.c.l.b16 %v2364
    %v2436 = vunpack.c.l.b16 %v2365
    %v2437 = vunpack.c.l.b16 %v2366
    %v2438 = vunpack.c.l.b16 %v2367
    %v2439 = vunpack.c.l.b16 %v2368
    %v2440 = vunpack.c.l.b16 %v2369
    %v2441 = vunpack.c.l.b16 %v2370
    %v2442 = vunpack.c.l.b16 %v2371
    %v2443 = vunpack.c.l.b16 %v2372
    %v2444 = vunpack.c.l.b16 %v2373
    %v2445 = vunpack.c.l.b16 %v2374
    %v2446 = vunpack.c.l.b16 %v2375
    %v2447 = vunpack.c.l.b16 %v2376
    %v2448 = vunpack.c.l.b16 %v2377
    %v2449 = vunpack.c.l.b16 %v2378
    %v2450 = vpack.c.b16 %v2419, %v2418
    %v2451 = vpack.c.b16 %v2421, %v2420
    %v2452 = vpack.c.b16 %v2423, %v2422
    %v2453 = vpack.c.b16 %v2425, %v2424
    %v2454 = vpack.c.b16 %v2427, %v2426
    %v2455 = vpack.c.b16 %v2429, %v2428
    %v2456 = vpack.c.b16 %v2431, %v2430
    %v2457 = vpack.c.b16 %v2433, %v2432
    %v2458 = vpack.c.b16 %v2435, %v2434
    %v2459 = vpack.c.b16 %v2437, %v2436
    %v2460 = vpack.c.b16 %v2439, %v2438
    %v2461 = vpack.c.b16 %v2441, %v2440
    %v2462 = vpack.c.b16 %v2443, %v2442
    %v2463 = vpack.c.b16 %v2445, %v2444
    %v2464 = vpack.c.b16 %v2447, %v2446
    %v2465 = vpack.c.b16 %v2449, %v2448
    %2482 = vmatprep.subr.bf16.mxu0 0
    %2483 = vmatpush1.bf16.msra.mxu0 %v2450
    %2484 = vmatprep.subr.bf16.mxu0 0
    %2485 = vmatpush1.bf16.msra.mxu0 %v2451
    %2486 = vmatprep.subr.bf16.mxu0 0
    %2487 = vmatpush1.bf16.msra.mxu0 %v2452
    %2488 = vmatprep.subr.bf16.mxu0 0
    %2489 = vmatpush1.bf16.msra.mxu0 %v2453
    %2490 = vmatprep.subr.bf16.mxu0 0
    %2491 = vmatpush1.bf16.msra.mxu0 %v2454
    %2492 = vmatprep.subr.bf16.mxu0 0
    %2493 = vmatpush1.bf16.msra.mxu0 %v2455
    %2494 = vmatprep.subr.bf16.mxu0 0
    %2495 = vmatpush1.bf16.msra.mxu0 %v2456
    %2496 = vmatprep.subr.bf16.mxu0 0
    %2497 = vmatpush1.bf16.msra.mxu0 %v2457
    %2498 = vmatprep.subr.bf16.mxu0 0
    %2499 = vmatpush1.bf16.msra.mxu0 %v2458
    %2500 = vmatprep.subr.bf16.mxu0 0
    %2501 = vmatpush1.bf16.msra.mxu0 %v2459
    %2502 = vmatprep.subr.bf16.mxu0 0
    %2503 = vmatpush1.bf16.msra.mxu0 %v2460
    %2504 = vmatprep.subr.bf16.mxu0 0
    %2505 = vmatpush1.bf16.msra.mxu0 %v2461
    %2506 = vmatprep.subr.bf16.mxu0 0
    %2507 = vmatpush1.bf16.msra.mxu0 %v2462
    %2508 = vmatprep.subr.bf16.mxu0 0
    %2509 = vmatpush1.bf16.msra.mxu0 %v2463
    %2510 = vmatprep.subr.bf16.mxu0 0
    %2511 = vmatpush1.bf16.msra.mxu0 %v2464
    %2512 = vmatprep.subr.bf16.mxu0 0
    %2513 = vmatpush1.bf16.msra.mxu0 %v2465
    %2514 = vmatprep.mubr.bf16.mxu0 %v2346
    %2515 = vmatmul.mubr.bf16.gmra.mrb[0].mxu0 %v2345
    %v2516 = vpop.f32.mrb[0].mxu0
    %v2517 = vadd.f32 %v2384, %v2516
    %v2518 = vpop.f32.mrb[0].mxu0
    %v2519 = vpop.f32.mrb[0].mxu0
    %v2520 = vpop.f32.mrb[0].mxu0
    %2521 = vdwg.mxu0
    %v2522 = vsub.f32 0.0, %v2517
    %v2523 = vmul.f32 %v2522, 1.442695
    %v2524 = vpow.pop %v2523
    %v2525 = vadd.f32 %v2524, 1.0
    %v2526 = vrcp.pop %v2525
    %vm2527 = vcmask 7168
    %2528 = vst.msk [vmem:[%s7] sm:$0xff] %vm2527, %v2526
    // Predicated region
    $region46: #{tpu_custom_call.1} parent=1 // pred_check
      _
    $region47: #{tpu_custom_call.1} parent=1 // pred_check_branch
      %2530 = sbr.rel (0) target = $region49
    $region48: #{tpu_custom_call.1} parent=1 // pred_region
      _
    $region49: #{tpu_custom_call.1} parent=1 // pred_fallthru
      _
    // Predicated region
    $region50: #{tpu_custom_call.1} parent=1 // pred_check
      _
    $region51: #{tpu_custom_call.1} parent=1 // pred_check_branch
      %2532 = sbr.rel (0) target = $region53
    $region52: #{tpu_custom_call.1} parent=1 // pred_region
      _
    $region53: #{tpu_custom_call.1} parent=1 // pred_fallthru
      _
    %2533 = vsyncpa [#allocation4], 1
    %2534 = vsyncpa [#allocation6], 1
    %2535 = vsyncpa [#allocation9], 1

</llo_original>
